<compile_context>
chip_gen: v6e
topology: v6e:2x2x1
jax: 0.10.0
libtpu: 0.0.40
codegen_flags: <defaults>
</compile_context>

<pallas_src>
import jax
import jax.numpy as jnp
from jax.experimental import pallas as pl
from jax.experimental.pallas import tpu as pltpu


def _make_gcn_kernel(num_layers):
    """Kernel refs: (occ2d, [BigW_l, c_l] * L, D_occ, D_g, bd, out)."""

    def kernel(*refs):
        occ_ref = refs[0]
        layer_refs = refs[1:1 + 2 * num_layers]
        docc_ref, dg_ref, bd_ref, out_ref = refs[1 + 2 * num_layers:]

        occ = occ_ref[...]                                  # (tb, N*S)
        g = occ
        for l in range(num_layers):
            w = layer_refs[2 * l][...]                      # (N*F_in, N*H) f32
            c = layer_refs[2 * l + 1][...]                  # (1, N*H)     f32
            g = jnp.dot(g, w, preferred_element_type=jnp.float32) + c
            g = jnp.maximum(g, 0.0)

        # Decoder: occ part + gcn part (block-diagonal kron matrices), bias in SMEM.
        y = (jnp.dot(occ, docc_ref[...], preferred_element_type=jnp.float32)
             + jnp.dot(g, dg_ref[...], preferred_element_type=jnp.float32)
             + bd_ref[0])                                   # (tb, N)
        out_ref[...] = y.astype(out_ref.dtype)

    return kernel


def _choose_batch_tile(batch, cap=512, split_threshold=128):
    """Large batch tile (amortizes ~0.35us/step), multiple of 8 when tiled,
    >=2 tiles when batch is big enough to shard across 2 TensorCores (v7x)."""
    if batch <= cap and batch < split_threshold:
        return batch, 1, batch                      # single tile, no padding
    n_tiles = max(-(-batch // cap), 2)
    tb = -(-batch // n_tiles)
    tb = ((tb + 7) // 8) * 8
    grid_n = -(-batch // tb)
    return tb, grid_n, grid_n * tb


def gcn_forward(occ, a_norm, wenc, benc, gcn_weights, gcn_biases, wdec, bdec,
                *, tb_cap=512):
    """Pallas equivalent of Gcn.forward(occ, extra_feat='None') with n_fea == 1."""
    occ = jnp.asarray(occ)                      # keep incoming dtype (bf16 ok)
    B, N, S = occ.shape
    H = jnp.asarray(gcn_weights[0]).shape[0]
    L = len(gcn_weights)
    f32 = jnp.float32

    # ---- one-time (tiny) wrapper-side algebra ------------------------------
    A = jnp.asarray(a_norm, f32).reshape(N, N)
    Wenc = jnp.asarray(wenc, f32).reshape(N, N)
    benc_v = jnp.asarray(benc, f32).reshape(N)
    AW = A @ Wenc                               # encoder folded into layer 1
    Abenc = A @ benc_v                          # (N,)
    rowA = jnp.sum(A, axis=1)                   # (N,)

    big_ws, cs = [], []
    for l, (w, b) in enumerate(zip(gcn_weights, gcn_biases)):
        w = jnp.asarray(w, f32)                 # (H, F_in)  (PyTorch Linear)
        b = jnp.asarray(b, f32).reshape(-1)     # (H,)
        wt = w.T                                # (F_in, H)
        if l == 0:
            bigw = jnp.kron(AW.T, wt)           # (N*S, N*H)
            c = (Abenc[:, None] * jnp.sum(w, axis=1)[None, :]
                 + rowA[:, None] * b[None, :])  # (N, H)
        else:
            bigw = jnp.kron(A.T, wt)            # (N*H, N*H)
            c = rowA[:, None] * b[None, :]
        big_ws.append(bigw)
        cs.append(c.reshape(1, N * H))

    wdec_v = jnp.asarray(wdec, f32).reshape(S + H)
    eyeN = jnp.eye(N, dtype=f32)
    d_occ = jnp.kron(eyeN, wdec_v[:S].reshape(S, 1))   # (N*S, N)
    d_g = jnp.kron(eyeN, wdec_v[S:].reshape(H, 1))     # (N*H, N)
    bd = jnp.asarray(bdec, f32).reshape(1)

    # ---- batch tiling (cdiv + single pad; no tb=1 slow path) ---------------
    tb, grid_n, B_pad = _choose_batch_tile(B, cap=tb_cap)
    occ2d = occ.reshape(B, N * S)               # free metadata reshape
    if B_pad != B:
        occ2d = jnp.pad(occ2d, ((0, B_pad - B), (0, 0)))

    # ---- specs -------------------------------------------------------------
    def _const_spec(arr):
        zeros = (0,) * arr.ndim
        return pl.BlockSpec(arr.shape, lambda i, _z=zeros: _z)

    const_ops = []
    for bw, c in zip(big_ws, cs):
        const_ops += [bw, c]
    const_ops += [d_occ, d_g]

    in_specs = [pl.BlockSpec((tb, N * S), lambda i: (i, 0))]
    in_specs += [_const_spec(a) for a in const_ops]
    in_specs += [pl.BlockSpec(memory_space=pltpu.MemorySpace.SMEM)]   # decoder bias

    out_spec = pl.BlockSpec((tb, N), lambda i: (i, 0))                # lane-dense-ish

    # Raise the scoped-VMEM limit only if the weight set actually needs it
    # (v5e default is 16 MiB; keep headroom vs v7x's 64 MiB physical).
    weight_bytes = sum(int(a.size) * a.dtype.itemsize for a in const_ops)
    est = (2 * weight_bytes
           + 2 * tb * N * S * occ2d.dtype.itemsize
           + 2 * tb * N * 4
           + 4 * tb * N * H * 4)
    if est > 12 * 1024 * 1024:
        compiler_params = pltpu.CompilerParams(
            dimension_semantics=("parallel",),
            vmem_limit_bytes=min(int(est * 3 // 2), 56 * 1024 * 1024))
    else:
        compiler_params = pltpu.CompilerParams(
            dimension_semantics=("parallel",))

    out = pl.pallas_call(
        _make_gcn_kernel(L),
        out_shape=jax.ShapeDtypeStruct((B_pad, N), occ.dtype),
        grid_spec=pltpu.PrefetchScalarGridSpec(
            num_scalar_prefetch=0,
            grid=(grid_n,),
            in_specs=in_specs,
            out_specs=out_spec,
        ),
        compiler_params=compiler_params,
    )(occ2d, *const_ops, bd)

    if B_pad != B:
        out = out[:B]
    return jnp.squeeze(out)          # mirrors torch.squeeze


if __name__ == "__main__":
    # Small shapes consistent with the module: nodes=16, seq=12, n_fea=1,
    # gcn_hidden=32, gcn_layers=2, batch=2.
    nodes, seq, n_fea, batch, hidden, gcn_layers = 16, 12, 1, 2, 32, 2

    key = jax.random.PRNGKey(0)
    ks = jax.random.split(key, 10)

    # Symmetric adjacency with self loops (keeps D^-1/2 finite), normalized as
    # in Gcn.__init__ : A = D^-1/2 adj D^-1/2 (plain-JAX constructor work).
    adj = (jax.random.uniform(ks[0], (nodes, nodes)) < 0.3).astype(jnp.float32)
    adj = jnp.maximum(adj, adj.T)
    adj = adj.at[jnp.arange(nodes), jnp.arange(nodes)].set(1.0)
    deg = jnp.sum(adj, axis=0)
    inv_sqrt_deg = 1.0 / jnp.sqrt(deg)
    a_norm = adj * inv_sqrt_deg[:, None] * inv_sqrt_deg[None, :]

    occ = jax.random.normal(ks[1], (batch, nodes, seq), dtype=jnp.float32)

    def u(k, shape, fan_in):
        bound = 1.0 / (fan_in ** 0.5)
        return jax.random.uniform(k, shape, minval=-bound, maxval=bound,
                                  dtype=jnp.float32)

    # Synthetic (deterministic) parameters with PyTorch-style init bounds.
    wenc = u(ks[2], (nodes, nodes), nodes)        # Conv2d weight[:, :, 0, 0]
    benc = u(ks[3], (nodes,), nodes)
    w1 = u(ks[4], (hidden, seq), seq)             # Linear(seq, hidden)
    b1 = u(ks[5], (hidden,), seq)
    w2 = u(ks[6], (hidden, hidden), hidden)       # Linear(hidden, hidden)
    b2 = u(ks[7], (hidden,), hidden)
    wdec = u(ks[8], (1, seq + hidden), seq + hidden)
    bdec = u(ks[9], (1,), seq + hidden)

    gcn_ws = [w1, w2]
    gcn_bs = [b1, b2]

    out = gcn_forward(occ, a_norm, wenc, benc, gcn_ws, gcn_bs, wdec, bdec)
    out = jax.block_until_ready(out)

    # Pure-JAX reference of the same forward pass.
    def ref_forward(occ):
        x = jnp.einsum('on,bns->bos', wenc, occ) + benc[None, :, None]
        g = x
        for w, b in zip(gcn_ws, gcn_bs):
            g = jnp.einsum('bnf,hf->bnh', g, w) + b
            g = jnp.einsum('mn,bnh->bmh', a_norm, g)
            g = jax.nn.relu(g)
        comb = jnp.concatenate([occ, g], axis=-1)
        y = comb @ wdec.T + bdec
        return jnp.squeeze(y)

    ref = ref_forward(occ)
    assert out.shape == (batch, nodes), out.shape
    assert jnp.allclose(out, ref, atol=2e-2, rtol=2e-2), (
        float(jnp.max(jnp.abs(out - ref))))

    print("KERNEL_OK")
</pallas_src>

<mosaic_0001>
module attributes {stable_mosaic.version = 11 : i64} {
  func.func @kernel(%arg0: i32, %arg1: memref<2x192xf32, #tpu.memory_space<vmem>>, %arg2: memref<192x512xf32, #tpu.memory_space<vmem>>, %arg3: memref<1x512xf32, #tpu.memory_space<vmem>>, %arg4: memref<512x512xf32, #tpu.memory_space<vmem>>, %arg5: memref<1x512xf32, #tpu.memory_space<vmem>>, %arg6: memref<192x16xf32, #tpu.memory_space<vmem>>, %arg7: memref<512x16xf32, #tpu.memory_space<vmem>>, %arg8: memref<1xf32, #tpu.memory_space<smem>>, %arg9: memref<2x16xf32, #tpu.memory_space<vmem>>) attributes {dimension_semantics = [#tpu.dimension_semantics<parallel>], iteration_bounds = array<i64: 1>, scalar_prefetch = 0 : i64, scratch_operands = 0 : i64, tpu.core_type = #tpu.core_type<tc>, window_params = [{transform_indices = @transform_0, window_bounds = array<i64: 2, 192>}, {pipeline_mode = #tpu.pipeline_mode<synchronous>, transform_indices = @transform_1, window_bounds = array<i64: 192, 512>}, {pipeline_mode = #tpu.pipeline_mode<synchronous>, transform_indices = @transform_2, window_bounds = array<i64: 1, 512>}, {pipeline_mode = #tpu.pipeline_mode<synchronous>, transform_indices = @transform_3, window_bounds = array<i64: 512, 512>}, {pipeline_mode = #tpu.pipeline_mode<synchronous>, transform_indices = @transform_4, window_bounds = array<i64: 1, 512>}, {pipeline_mode = #tpu.pipeline_mode<synchronous>, transform_indices = @transform_5, window_bounds = array<i64: 192, 16>}, {pipeline_mode = #tpu.pipeline_mode<synchronous>, transform_indices = @transform_6, window_bounds = array<i64: 512, 16>}, {transform_indices = @transform_7, window_bounds = array<i64: 1>}, {transform_indices = @transform_8, window_bounds = array<i64: 2, 16>}]} {
    %c0 = arith.constant 0 : index
    %c0_0 = arith.constant 0 : index
    %0 = vector.load %arg1[%c0, %c0_0] : memref<2x192xf32, #tpu.memory_space<vmem>>, vector<2x192xf32>
    %c0_1 = arith.constant 0 : index
    %c0_2 = arith.constant 0 : index
    %1 = vector.load %arg2[%c0_1, %c0_2] : memref<192x512xf32, #tpu.memory_space<vmem>>, vector<192x512xf32>
    %c0_3 = arith.constant 0 : index
    %c0_4 = arith.constant 0 : index
    %2 = vector.load %arg3[%c0_3, %c0_4] : memref<1x512xf32, #tpu.memory_space<vmem>>, vector<1x512xf32>
    %cst = arith.constant dense<0.000000e+00> : vector<2x512xf32>
    %3 = tpu.matmul %0, %1, %cst {dimension_numbers = #tpu.dot_dimension_numbers<[1], [0], [0], [1], [0, 0, 1, 1], [], []>} : vector<2x192xf32>, vector<192x512xf32>, vector<2x512xf32> -> vector<2x512xf32>
    %4 = vector.broadcast %2 : vector<1x512xf32> to vector<2x512xf32>
    %5 = arith.addf %3, %4 : vector<2x512xf32>
    %cst_5 = arith.constant 0.000000e+00 : f32
    %6 = vector.broadcast %cst_5 : f32 to vector<2x512xf32>
    %7 = arith.maximumf %5, %6 : vector<2x512xf32>
    %c0_6 = arith.constant 0 : index
    %c0_7 = arith.constant 0 : index
    %8 = vector.load %arg4[%c0_6, %c0_7] : memref<512x512xf32, #tpu.memory_space<vmem>>, vector<512x512xf32>
    %c0_8 = arith.constant 0 : index
    %c0_9 = arith.constant 0 : index
    %9 = vector.load %arg5[%c0_8, %c0_9] : memref<1x512xf32, #tpu.memory_space<vmem>>, vector<1x512xf32>
    %cst_10 = arith.constant dense<0.000000e+00> : vector<2x512xf32>
    %10 = tpu.matmul %7, %8, %cst_10 {dimension_numbers = #tpu.dot_dimension_numbers<[1], [0], [0], [1], [0, 0, 1, 1], [], []>} : vector<2x512xf32>, vector<512x512xf32>, vector<2x512xf32> -> vector<2x512xf32>
    %11 = vector.broadcast %9 : vector<1x512xf32> to vector<2x512xf32>
    %12 = arith.addf %10, %11 : vector<2x512xf32>
    %cst_11 = arith.constant 0.000000e+00 : f32
    %13 = vector.broadcast %cst_11 : f32 to vector<2x512xf32>
    %14 = arith.maximumf %12, %13 : vector<2x512xf32>
    %c0_12 = arith.constant 0 : index
    %c0_13 = arith.constant 0 : index
    %15 = vector.load %arg6[%c0_12, %c0_13] : memref<192x16xf32, #tpu.memory_space<vmem>>, vector<192x16xf32>
    %cst_14 = arith.constant dense<0.000000e+00> : vector<2x16xf32>
    %16 = tpu.matmul %0, %15, %cst_14 {dimension_numbers = #tpu.dot_dimension_numbers<[1], [0], [0], [1], [0, 0, 1, 1], [], []>} : vector<2x192xf32>, vector<192x16xf32>, vector<2x16xf32> -> vector<2x16xf32>
    %c0_15 = arith.constant 0 : index
    %c0_16 = arith.constant 0 : index
    %17 = vector.load %arg7[%c0_15, %c0_16] : memref<512x16xf32, #tpu.memory_space<vmem>>, vector<512x16xf32>
    %cst_17 = arith.constant dense<0.000000e+00> : vector<2x16xf32>
    %18 = tpu.matmul %14, %17, %cst_17 {dimension_numbers = #tpu.dot_dimension_numbers<[1], [0], [0], [1], [0, 0, 1, 1], [], []>} : vector<2x512xf32>, vector<512x16xf32>, vector<2x16xf32> -> vector<2x16xf32>
    %19 = arith.addf %16, %18 : vector<2x16xf32>
    %c0_18 = arith.constant 0 : index
    %20 = memref.load %arg8[%c0_18] : memref<1xf32, #tpu.memory_space<smem>>
    %21 = vector.broadcast %20 : f32 to vector<2x16xf32>
    %22 = arith.addf %19, %21 : vector<2x16xf32>
    %c0_19 = arith.constant 0 : index
    %c0_20 = arith.constant 0 : index
    %23 = vector.load %arg9[%c0_19, %c0_20] : memref<2x16xf32, #tpu.memory_space<vmem>>, vector<2x16xf32>
    tpu.vector_store %arg9[%c0_19, %c0_20], %22 {strides = array<i32>} : memref<2x16xf32, #tpu.memory_space<vmem>>, vector<2x16xf32>,
    return
  }
  func.func @transform_0(%arg0: i32) -> (i32, i32) {
    %c0_i32 = arith.constant 0 : i32
    %c0_i32_0 = arith.constant 0 : i32
    return %arg0, %c0_i32 : i32, i32
  }
  func.func @transform_1(%arg0: i32) -> (i32, i32) {
    %c0_i32 = arith.constant 0 : i32
    %c0_i32_0 = arith.constant 0 : i32
    %c0_i32_1 = arith.constant 0 : i32
    return %c0_i32, %c0_i32_0 : i32, i32
  }
  func.func @transform_2(%arg0: i32) -> (i32, i32) {
    %c0_i32 = arith.constant 0 : i32
    %c0_i32_0 = arith.constant 0 : i32
    %c0_i32_1 = arith.constant 0 : i32
    return %c0_i32, %c0_i32_0 : i32, i32
  }
  func.func @transform_3(%arg0: i32) -> (i32, i32) {
    %c0_i32 = arith.constant 0 : i32
    %c0_i32_0 = arith.constant 0 : i32
    %c0_i32_1 = arith.constant 0 : i32
    return %c0_i32, %c0_i32_0 : i32, i32
  }
  func.func @transform_4(%arg0: i32) -> (i32, i32) {
    %c0_i32 = arith.constant 0 : i32
    %c0_i32_0 = arith.constant 0 : i32
    %c0_i32_1 = arith.constant 0 : i32
    return %c0_i32, %c0_i32_0 : i32, i32
  }
  func.func @transform_5(%arg0: i32) -> (i32, i32) {
    %c0_i32 = arith.constant 0 : i32
    %c0_i32_0 = arith.constant 0 : i32
    %c0_i32_1 = arith.constant 0 : i32
    return %c0_i32, %c0_i32_0 : i32, i32
  }
  func.func @transform_6(%arg0: i32) -> (i32, i32) {
    %c0_i32 = arith.constant 0 : i32
    %c0_i32_0 = arith.constant 0 : i32
    %c0_i32_1 = arith.constant 0 : i32
    return %c0_i32, %c0_i32_0 : i32, i32
  }
  func.func @transform_7(%arg0: i32) -> i32 {
    %c0_i32 = arith.constant 0 : i32
    %c0_i32_0 = arith.constant 0 : i32
    return %c0_i32 : i32
  }
  func.func @transform_8(%arg0: i32) -> (i32, i32) {
    %c0_i32 = arith.constant 0 : i32
    %c0_i32_0 = arith.constant 0 : i32
    return %arg0, %c0_i32 : i32, i32
  }
}

</mosaic_0001>

<llo_original>
// kernel: tpu_custom_call.1
$region0: #{tpu_custom_call.1}
  #allocation0 [shape = 'u32[]', space=smem, size = 0x4, offset = 0x4, fixed_abs, tag = 'smem constant byte address 0x4 - core index']
  #allocation1 [shape = 'u32[144,128]{1,0:T(1,128)}', space=vmem, size = 0x12000, scoped, tag = 'internal scratch']
  #allocation2 [shape = 'f32[1]{0:T(128)S(6)}', space=smem, size = 0x200, scoped, tag = 'scoped memory for tpu_custom_call.1']
  %s0 = inlined_call_operand.vmem [shape: f32[2,192], index: 0, kind: input, shape index: {}]
  %s1 = inlined_call_operand.vmem [shape: f32[192,512], index: 1, kind: input, shape index: {}]
  %s2 = inlined_call_operand.vmem [shape: f32[1,512], index: 2, kind: input, shape index: {}]
  %s3 = inlined_call_operand.hbm [shape: f32[512,512], index: 3, kind: input, shape index: {}]
  %s4 = inlined_call_operand.vmem [shape: f32[1,512], index: 4, kind: input, shape index: {}]
  %s5 = inlined_call_operand.vmem [shape: f32[192,16], index: 5, kind: input, shape index: {}]
  %s6 = inlined_call_operand.vmem [shape: f32[512,16], index: 6, kind: input, shape index: {}]
  %s7 = inlined_call_operand.<no memory space> [shape: f32[1], index: 7, kind: input, shape index: {}]
  %s8 = inlined_call_operand.hbm [shape: f32[2,16], index: 8, kind: output, shape index: {}]
  %s9 = sld [smem:[#allocation0]]
  $region46: #{tpu_custom_call.1} parent=0
    _
  %s11 = ssub.s32 1, %s9
  %s12 = scalar_select 0, %s11, %s9
  %13 = sst [smem:[#allocation2]] %s7
  $region1: #{tpu_custom_call.1} parent=0
    #allocation3 [shape = 'u8[1048576]{0}', space=vmem, size = 0x100000, scoped, tag = 'input window, operand 3, single buffered']
    #allocation4 [shape = 's32[1]{0}', space=sflag, size = 0x4, scoped, tag = 'scoped memory for tpu_custom_call.1']
    #allocation5 [shape = 's32[1]{0}', space=sflag, size = 0x4, scoped, tag = 'scoped memory for tpu_custom_call.1']
    #allocation6 [shape = 'u8[1024]{0}', space=vmem, size = 0x400, scoped, tag = 'output window, operand 0, single buffered']
    %14 = vsyncpa [#allocation4], 0
    %15 = vsyncpa [#allocation5], 0
    // Predicated region
    $region2: #{tpu_custom_call.1} parent=1 // pred_check
      _
    $region3: #{tpu_custom_call.1} parent=1 // pred_check_branch
      %17 = sbr.rel (0) target = $region5
    $region4: #{tpu_custom_call.1} parent=1 // pred_region
      _
    $region5: #{tpu_custom_call.1} parent=1 // pred_fallthru
      _
    // Predicated region
    $region6: #{tpu_custom_call.1} parent=1 // pred_check
      _
    $region7: #{tpu_custom_call.1} parent=1 // pred_check_branch
      %19 = sbr.rel (0) target = $region9
    $region8: #{tpu_custom_call.1} parent=1 // pred_region
      _
    $region9: #{tpu_custom_call.1} parent=1 // pred_fallthru
      _
    // Predicated region
    $region10: #{tpu_custom_call.1} parent=1 // pred_check
      _
    $region11: #{tpu_custom_call.1} parent=1 // pred_check_branch
      %21 = sbr.rel (0) target = $region13
    $region12: #{tpu_custom_call.1} parent=1 // pred_region
      _
    $region13: #{tpu_custom_call.1} parent=1 // pred_fallthru
      _
    // Predicated region
    $region14: #{tpu_custom_call.1} parent=1 // pred_check
      _
    $region15: #{tpu_custom_call.1} parent=1 // pred_check_branch
      %23 = sbr.rel (0) target = $region17
    $region16: #{tpu_custom_call.1} parent=1 // pred_region
      %s25 = ssub.s32 32768, 32768
      %26 = vsyncadd [#allocation4], %s25
      %s27 = sshll.u32 [#allocation3], 4
      %s28 = int_to_ptr.vmem [resolvable:$true] %s27
      %33 = dma.hbm_to_vmem [thread:$0]  %s3, 32768, %s28, [#allocation4], 512, 512, 32
    $region17: #{tpu_custom_call.1} parent=1 // pred_fallthru
      _
    // Predicated region
    $region18: #{tpu_custom_call.1} parent=1 // pred_check
      _
    $region19: #{tpu_custom_call.1} parent=1 // pred_check_branch
      %35 = sbr.rel (0) target = $region21
    $region20: #{tpu_custom_call.1} parent=1 // pred_region
      _
    $region21: #{tpu_custom_call.1} parent=1 // pred_fallthru
      _
    // Predicated region
    $region22: #{tpu_custom_call.1} parent=1 // pred_check
      _
    $region23: #{tpu_custom_call.1} parent=1 // pred_check_branch
      %37 = sbr.rel (0) target = $region25
    $region24: #{tpu_custom_call.1} parent=1 // pred_region
      _
    $region25: #{tpu_custom_call.1} parent=1 // pred_fallthru
      _
    // Predicated region
    $region26: #{tpu_custom_call.1} parent=1 // pred_check
      _
    $region27: #{tpu_custom_call.1} parent=1 // pred_check_branch
      %39 = sbr.rel (0) target = $region29
    $region28: #{tpu_custom_call.1} parent=1 // pred_region
      _
    $region29: #{tpu_custom_call.1} parent=1 // pred_fallthru
      _
    // Predicated region
    $region30: #{tpu_custom_call.1} parent=1 // pred_check
      _
    $region31: #{tpu_custom_call.1} parent=1 // pred_check_branch
      %41 = sbr.rel (0) target = $region33
    $region32: #{tpu_custom_call.1} parent=1 // pred_region
      _
    $region33: #{tpu_custom_call.1} parent=1 // pred_fallthru
      _
    // Predicated region
    $region34: #{tpu_custom_call.1} parent=1 // pred_check
      _
    $region35: #{tpu_custom_call.1} parent=1 // pred_check_branch
      %43 = sbr.rel (0) target = $region37
    $region36: #{tpu_custom_call.1} parent=1 // pred_region
      %44 = dma.done [#allocation4], 32768
    $region37: #{tpu_custom_call.1} parent=1 // pred_fallthru
      _
    %v45 = vld [vmem:[%s0] sm:$0xf]
    %v46 = vld [vmem:[%s1] sm:$0xff]
    %v47 = vld [vmem:[%s1 + $0x8] sm:$0xff]
    %v48 = vld [vmem:[%s1 + $0x10] sm:$0xff]
    %v49 = vld [vmem:[%s1 + $0x18] sm:$0xff]
    %v50 = vld [vmem:[%s1 + $0x20] sm:$0xff]
    %v51 = vld [vmem:[%s1 + $0x28] sm:$0xff]
    %v52 = vld [vmem:[%s1 + $0x30] sm:$0xff]
    %v53 = vld [vmem:[%s1 + $0x38] sm:$0xff]
    %v54 = vld [vmem:[%s1 + $0x40] sm:$0xff]
    %v55 = vld [vmem:[%s1 + $0x48] sm:$0xff]
    %v56 = vld [vmem:[%s1 + $0x50] sm:$0xff]
    %v57 = vld [vmem:[%s1 + $0x58] sm:$0xff]
    %v58 = vld [vmem:[%s1 + $0x60] sm:$0xff]
    %v59 = vld [vmem:[%s1 + $0x68] sm:$0xff]
    %v60 = vld [vmem:[%s1 + $0x70] sm:$0xff]
    %v61 = vld [vmem:[%s1 + $0x78] sm:$0xff]
    %v62 = vld [vmem:[%s1 + $0x80] sm:$0xff]
    %v63 = vld [vmem:[%s1 + $0x88] sm:$0xff]
    %v64 = vld [vmem:[%s1 + $0x90] sm:$0xff]
    %v65 = vld [vmem:[%s1 + $0x98] sm:$0xff]
    %v66 = vld [vmem:[%s1 + $0xa0] sm:$0xff]
    %v67 = vld [vmem:[%s1 + $0xa8] sm:$0xff]
    %v68 = vld [vmem:[%s1 + $0xb0] sm:$0xff]
    %v69 = vld [vmem:[%s1 + $0xb8] sm:$0xff]
    %v70 = vld [vmem:[%s1 + $0xc0] sm:$0xff]
    %v71 = vld [vmem:[%s1 + $0xc8] sm:$0xff]
    %v72 = vld [vmem:[%s1 + $0xd0] sm:$0xff]
    %v73 = vld [vmem:[%s1 + $0xd8] sm:$0xff]
    %v74 = vld [vmem:[%s1 + $0xe0] sm:$0xff]
    %v75 = vld [vmem:[%s1 + $0xe8] sm:$0xff]
    %v76 = vld [vmem:[%s1 + $0xf0] sm:$0xff]
    %v77 = vld [vmem:[%s1 + $0xf8] sm:$0xff]
    %v78 = vld [vmem:[%s1 + $0x100] sm:$0xff]
    %v79 = vld [vmem:[%s1 + $0x108] sm:$0xff]
    %v80 = vld [vmem:[%s1 + $0x110] sm:$0xff]
    %v81 = vld [vmem:[%s1 + $0x118] sm:$0xff]
    %v82 = vld [vmem:[%s1 + $0x120] sm:$0xff]
    %v83 = vld [vmem:[%s1 + $0x128] sm:$0xff]
    %v84 = vld [vmem:[%s1 + $0x130] sm:$0xff]
    %v85 = vld [vmem:[%s1 + $0x138] sm:$0xff]
    %v86 = vld [vmem:[%s1 + $0x140] sm:$0xff]
    %v87 = vld [vmem:[%s1 + $0x148] sm:$0xff]
    %v88 = vld [vmem:[%s1 + $0x150] sm:$0xff]
    %v89 = vld [vmem:[%s1 + $0x158] sm:$0xff]
    %v90 = vld [vmem:[%s1 + $0x160] sm:$0xff]
    %v91 = vld [vmem:[%s1 + $0x168] sm:$0xff]
    %v92 = vld [vmem:[%s1 + $0x170] sm:$0xff]
    %v93 = vld [vmem:[%s1 + $0x178] sm:$0xff]
    %v94 = vld [vmem:[%s1 + $0x180] sm:$0xff]
    %v95 = vld [vmem:[%s1 + $0x188] sm:$0xff]
    %v96 = vld [vmem:[%s1 + $0x190] sm:$0xff]
    %v97 = vld [vmem:[%s1 + $0x198] sm:$0xff]
    %v98 = vld [vmem:[%s1 + $0x1a0] sm:$0xff]
    %v99 = vld [vmem:[%s1 + $0x1a8] sm:$0xff]
    %v100 = vld [vmem:[%s1 + $0x1b0] sm:$0xff]
    %v101 = vld [vmem:[%s1 + $0x1b8] sm:$0xff]
    %v102 = vld [vmem:[%s1 + $0x1c0] sm:$0xff]
    %v103 = vld [vmem:[%s1 + $0x1c8] sm:$0xff]
    %v104 = vld [vmem:[%s1 + $0x1d0] sm:$0xff]
    %v105 = vld [vmem:[%s1 + $0x1d8] sm:$0xff]
    %v106 = vld [vmem:[%s1 + $0x1e0] sm:$0xff]
    %v107 = vld [vmem:[%s1 + $0x1e8] sm:$0xff]
    %v108 = vld [vmem:[%s1 + $0x1f0] sm:$0xff]
    %v109 = vld [vmem:[%s1 + $0x1f8] sm:$0xff]
    %v110 = vld [vmem:[%s1 + $0x200] sm:$0xff]
    %v111 = vld [vmem:[%s1 + $0x208] sm:$0xff]
    %v112 = vld [vmem:[%s1 + $0x210] sm:$0xff]
    %v113 = vld [vmem:[%s1 + $0x218] sm:$0xff]
    %v114 = vld [vmem:[%s1 + $0x220] sm:$0xff]
    %v115 = vld [vmem:[%s1 + $0x228] sm:$0xff]
    %v116 = vld [vmem:[%s1 + $0x230] sm:$0xff]
    %v117 = vld [vmem:[%s1 + $0x238] sm:$0xff]
    %v118 = vld [vmem:[%s1 + $0x240] sm:$0xff]
    %v119 = vld [vmem:[%s1 + $0x248] sm:$0xff]
    %v120 = vld [vmem:[%s1 + $0x250] sm:$0xff]
    %v121 = vld [vmem:[%s1 + $0x258] sm:$0xff]
    %v122 = vld [vmem:[%s1 + $0x260] sm:$0xff]
    %v123 = vld [vmem:[%s1 + $0x268] sm:$0xff]
    %v124 = vld [vmem:[%s1 + $0x270] sm:$0xff]
    %v125 = vld [vmem:[%s1 + $0x278] sm:$0xff]
    %v126 = vld [vmem:[%s1 + $0x280] sm:$0xff]
    %v127 = vld [vmem:[%s1 + $0x288] sm:$0xff]
    %v128 = vld [vmem:[%s1 + $0x290] sm:$0xff]
    %v129 = vld [vmem:[%s1 + $0x298] sm:$0xff]
    %v130 = vld [vmem:[%s1 + $0x2a0] sm:$0xff]
    %v131 = vld [vmem:[%s1 + $0x2a8] sm:$0xff]
    %v132 = vld [vmem:[%s1 + $0x2b0] sm:$0xff]
    %v133 = vld [vmem:[%s1 + $0x2b8] sm:$0xff]
    %v134 = vld [vmem:[%s1 + $0x2c0] sm:$0xff]
    %v135 = vld [vmem:[%s1 + $0x2c8] sm:$0xff]
    %v136 = vld [vmem:[%s1 + $0x2d0] sm:$0xff]
    %v137 = vld [vmem:[%s1 + $0x2d8] sm:$0xff]
    %v138 = vld [vmem:[%s1 + $0x2e0] sm:$0xff]
    %v139 = vld [vmem:[%s1 + $0x2e8] sm:$0xff]
    %v140 = vld [vmem:[%s1 + $0x2f0] sm:$0xff]
    %v141 = vld [vmem:[%s1 + $0x2f8] sm:$0xff]
    %v142 = vld [vmem:[%s2] sm:$0xf]
    %v144 = vlaneseq
    %v145 = vshrl.u32 %v144, 7
    %v146 = vsub.s32 0, %v145
    %v147 = vrot.slane %v142, %v146
    %v148 = vlaneseq
    %v149 = vshrl.u32 %v148, 7
    %v150 = vsub.s32 1, %v149
    %v151 = vrot.slane %v142, %v150
    %v152 = vlaneseq
    %v153 = vshrl.u32 %v152, 7
    %v154 = vsub.s32 2, %v153
    %v155 = vrot.slane %v142, %v154
    %v156 = vlaneseq
    %v157 = vshrl.u32 %v156, 7
    %v158 = vsub.s32 3, %v157
    %v159 = vrot.slane %v142, %v158
    %v166 = vunpack.c.l.s4 1983009808
    %v167 = vunpack.c.0.s8 %v166
    %v168 = vlaneseq
    %v169 = vshrl.u32 %v168, 7
    %v170 = vsub.s32 %v167, %v169
    %v171 = vrot.slane %v45, %v170
    %v172 = vcombine.high %v171, %v171
    %vm174 = vcmask 523264
    %v175 = vsel %vm174, %v172, 0
    %177 = vmatprep.subr.mxu0 %v107
    %178 = vmatpush1.msra.mxu0 %v106
    %179 = vmatprep.subr.mxu0 %v103
    %180 = vmatpush1.msra.mxu0 %v102
    %181 = vmatprep.subr.mxu0 %v99
    %182 = vmatpush1.msra.mxu0 %v98
    %183 = vmatprep.subr.mxu0 %v95
    %184 = vmatpush1.msra.mxu0 %v94
    %185 = vmatprep.subr.mxu0 %v91
    %186 = vmatpush1.msra.mxu0 %v90
    %187 = vmatprep.subr.mxu0 %v87
    %188 = vmatpush1.msra.mxu0 %v86
    %189 = vmatprep.subr.mxu0 %v83
    %190 = vmatpush1.msra.mxu0 %v82
    %191 = vmatprep.subr.mxu0 %v79
    %192 = vmatpush1.msra.mxu0 %v78
    %193 = vmatprep.subr.mxu0 %v75
    %194 = vmatpush1.msra.mxu0 %v74
    %195 = vmatprep.subr.mxu0 %v71
    %196 = vmatpush1.msra.mxu0 %v70
    %197 = vmatprep.subr.mxu0 %v67
    %198 = vmatpush1.msra.mxu0 %v66
    %199 = vmatprep.subr.mxu0 %v63
    %200 = vmatpush1.msra.mxu0 %v62
    %201 = vmatprep.subr.mxu0 %v59
    %202 = vmatpush1.msra.mxu0 %v58
    %203 = vmatprep.subr.mxu0 %v55
    %204 = vmatpush1.msra.mxu0 %v54
    %205 = vmatprep.subr.mxu0 %v51
    %206 = vmatpush1.msra.mxu0 %v50
    %207 = vmatprep.subr.mxu0 %v47
    %208 = vmatpush1.msra.mxu0 %v46
    %209 = vmatprep.subr.mxu0 0.0
    %210 = vmatpush2.msra.mxu0 0.0
    %211 = vmatprep.subr.mxu0 0.0
    %212 = vmatpush2.msra.mxu0 0.0
    %213 = vmatprep.subr.mxu0 0.0
    %214 = vmatpush2.msra.mxu0 0.0
    %215 = vmatprep.subr.mxu0 0.0
    %216 = vmatpush2.msra.mxu0 0.0
    %217 = vmatprep.subr.mxu0 0.0
    %218 = vmatpush2.msra.mxu0 0.0
    %219 = vmatprep.subr.mxu0 0.0
    %220 = vmatpush2.msra.mxu0 0.0
    %221 = vmatprep.subr.mxu0 0.0
    %222 = vmatpush2.msra.mxu0 0.0
    %223 = vmatprep.subr.mxu0 0.0
    %224 = vmatpush2.msra.mxu0 0.0
    %225 = vmatprep.subr.mxu0 %v139
    %226 = vmatpush2.msra.mxu0 %v138
    %227 = vmatprep.subr.mxu0 %v135
    %228 = vmatpush2.msra.mxu0 %v134
    %229 = vmatprep.subr.mxu0 %v131
    %230 = vmatpush2.msra.mxu0 %v130
    %231 = vmatprep.subr.mxu0 %v127
    %232 = vmatpush2.msra.mxu0 %v126
    %233 = vmatprep.subr.mxu0 %v123
    %234 = vmatpush2.msra.mxu0 %v122
    %235 = vmatprep.subr.mxu0 %v119
    %236 = vmatpush2.msra.mxu0 %v118
    %237 = vmatprep.subr.mxu0 %v115
    %238 = vmatpush2.msra.mxu0 %v114
    %239 = vmatprep.subr.mxu0 %v111
    %240 = vmatpush2.msra.mxu0 %v110
    %241 = vmatprep.mubr.f32.mxu0 %v175
    %242 = vmatmul.mubr.f32.gmra.mxu0 %v171
    %v243 = vpop.f32.mrf.mxu0
    %v244 = vadd.f32 %v147, %v243
    %v245 = vpop.f32.mrf.mxu0
    %v246 = vadd.f32 %v151, %v245
    %247 = vdwg.mxu0
    %248 = vmatprep.subr.mxu0 %v109
    %249 = vmatpush1.msra.mxu0 %v108
    %250 = vmatprep.subr.mxu0 %v105
    %251 = vmatpush1.msra.mxu0 %v104
    %252 = vmatprep.subr.mxu0 %v101
    %253 = vmatpush1.msra.mxu0 %v100
    %254 = vmatprep.subr.mxu0 %v97
    %255 = vmatpush1.msra.mxu0 %v96
    %256 = vmatprep.subr.mxu0 %v93
    %257 = vmatpush1.msra.mxu0 %v92
    %258 = vmatprep.subr.mxu0 %v89
    %259 = vmatpush1.msra.mxu0 %v88
    %260 = vmatprep.subr.mxu0 %v85
    %261 = vmatpush1.msra.mxu0 %v84
    %262 = vmatprep.subr.mxu0 %v81
    %263 = vmatpush1.msra.mxu0 %v80
    %264 = vmatprep.subr.mxu0 %v77
    %265 = vmatpush1.msra.mxu0 %v76
    %266 = vmatprep.subr.mxu0 %v73
    %267 = vmatpush1.msra.mxu0 %v72
    %268 = vmatprep.subr.mxu0 %v69
    %269 = vmatpush1.msra.mxu0 %v68
    %270 = vmatprep.subr.mxu0 %v65
    %271 = vmatpush1.msra.mxu0 %v64
    %272 = vmatprep.subr.mxu0 %v61
    %273 = vmatpush1.msra.mxu0 %v60
    %274 = vmatprep.subr.mxu0 %v57
    %275 = vmatpush1.msra.mxu0 %v56
    %276 = vmatprep.subr.mxu0 %v53
    %277 = vmatpush1.msra.mxu0 %v52
    %278 = vmatprep.subr.mxu0 %v49
    %279 = vmatpush1.msra.mxu0 %v48
    %280 = vmatprep.subr.mxu0 0.0
    %281 = vmatpush2.msra.mxu0 0.0
    %282 = vmatprep.subr.mxu0 0.0
    %283 = vmatpush2.msra.mxu0 0.0
    %284 = vmatprep.subr.mxu0 0.0
    %285 = vmatpush2.msra.mxu0 0.0
    %286 = vmatprep.subr.mxu0 0.0
    %287 = vmatpush2.msra.mxu0 0.0
    %288 = vmatprep.subr.mxu0 0.0
    %289 = vmatpush2.msra.mxu0 0.0
    %290 = vmatprep.subr.mxu0 0.0
    %291 = vmatpush2.msra.mxu0 0.0
    %292 = vmatprep.subr.mxu0 0.0
    %293 = vmatpush2.msra.mxu0 0.0
    %294 = vmatprep.subr.mxu0 0.0
    %295 = vmatpush2.msra.mxu0 0.0
    %296 = vmatprep.subr.mxu0 %v141
    %297 = vmatpush2.msra.mxu0 %v140
    %298 = vmatprep.subr.mxu0 %v137
    %299 = vmatpush2.msra.mxu0 %v136
    %300 = vmatprep.subr.mxu0 %v133
    %301 = vmatpush2.msra.mxu0 %v132
    %302 = vmatprep.subr.mxu0 %v129
    %303 = vmatpush2.msra.mxu0 %v128
    %304 = vmatprep.subr.mxu0 %v125
    %305 = vmatpush2.msra.mxu0 %v124
    %306 = vmatprep.subr.mxu0 %v121
    %307 = vmatpush2.msra.mxu0 %v120
    %308 = vmatprep.subr.mxu0 %v117
    %309 = vmatpush2.msra.mxu0 %v116
    %310 = vmatprep.subr.mxu0 %v113
    %311 = vmatpush2.msra.mxu0 %v112
    %312 = vmatprep.mubr.f32.mxu0 %v175
    %313 = vmatmul.mubr.f32.gmra.mxu0 %v171
    %v314 = vpop.f32.mrf.mxu0
    %v315 = vadd.f32 %v155, %v314
    %v316 = vpop.f32.mrf.mxu0
    %v317 = vadd.f32 %v159, %v316
    %318 = vdwg.mxu0
    %v319 = vmax.f32 %v244, 0.0
    %v320 = vmax.f32 %v246, 0.0
    %v321 = vmax.f32 %v315, 0.0
    %v322 = vmax.f32 %v317, 0.0
    %v323 = vld [vmem:[#allocation3] sm:$0xff]
    %v324 = vld [vmem:[#allocation3 + $0x8] sm:$0xff]
    %v325 = vld [vmem:[#allocation3 + $0x10] sm:$0xff]
    %v326 = vld [vmem:[#allocation3 + $0x18] sm:$0xff]
    %v327 = vld [vmem:[#allocation3 + $0x20] sm:$0xff]
    %v328 = vld [vmem:[#allocation3 + $0x28] sm:$0xff]
    %v329 = vld [vmem:[#allocation3 + $0x30] sm:$0xff]
    %v330 = vld [vmem:[#allocation3 + $0x38] sm:$0xff]
    %v331 = vld [vmem:[#allocation3 + $0x40] sm:$0xff]
    %v332 = vld [vmem:[#allocation3 + $0x48] sm:$0xff]
    %v333 = vld [vmem:[#allocation3 + $0x50] sm:$0xff]
    %v334 = vld [vmem:[#allocation3 + $0x58] sm:$0xff]
    %v335 = vld [vmem:[#allocation3 + $0x60] sm:$0xff]
    %v336 = vld [vmem:[#allocation3 + $0x68] sm:$0xff]
    %v337 = vld [vmem:[#allocation3 + $0x70] sm:$0xff]
    %v338 = vld [vmem:[#allocation3 + $0x78] sm:$0xff]
    %v339 = vld [vmem:[#allocation3 + $0x80] sm:$0xff]
    %v340 = vld [vmem:[#allocation3 + $0x88] sm:$0xff]
    %v341 = vld [vmem:[#allocation3 + $0x90] sm:$0xff]
    %v342 = vld [vmem:[#allocation3 + $0x98] sm:$0xff]
    %v343 = vld [vmem:[#allocation3 + $0xa0] sm:$0xff]
    %v344 = vld [vmem:[#allocation3 + $0xa8] sm:$0xff]
    %v345 = vld [vmem:[#allocation3 + $0xb0] sm:$0xff]
    %v346 = vld [vmem:[#allocation3 + $0xb8] sm:$0xff]
    %v347 = vld [vmem:[#allocation3 + $0xc0] sm:$0xff]
    %v348 = vld [vmem:[#allocation3 + $0xc8] sm:$0xff]
    %v349 = vld [vmem:[#allocation3 + $0xd0] sm:$0xff]
    %v350 = vld [vmem:[#allocation3 + $0xd8] sm:$0xff]
    %v351 = vld [vmem:[#allocation3 + $0xe0] sm:$0xff]
    %v352 = vld [vmem:[#allocation3 + $0xe8] sm:$0xff]
    %v353 = vld [vmem:[#allocation3 + $0xf0] sm:$0xff]
    %v354 = vld [vmem:[#allocation3 + $0xf8] sm:$0xff]
    %v355 = vld [vmem:[#allocation3 + $0x100] sm:$0xff]
    %v356 = vld [vmem:[#allocation3 + $0x108] sm:$0xff]
    %v357 = vld [vmem:[#allocation3 + $0x110] sm:$0xff]
    %v358 = vld [vmem:[#allocation3 + $0x118] sm:$0xff]
    %v359 = vld [vmem:[#allocation3 + $0x120] sm:$0xff]
    %v360 = vld [vmem:[#allocation3 + $0x128] sm:$0xff]
    %v361 = vld [vmem:[#allocation3 + $0x130] sm:$0xff]
    %v362 = vld [vmem:[#allocation3 + $0x138] sm:$0xff]
    %v363 = vld [vmem:[#allocation3 + $0x140] sm:$0xff]
    %v364 = vld [vmem:[#allocation3 + $0x148] sm:$0xff]
    %v365 = vld [vmem:[#allocation3 + $0x150] sm:$0xff]
    %v366 = vld [vmem:[#allocation3 + $0x158] sm:$0xff]
    %v367 = vld [vmem:[#allocation3 + $0x160] sm:$0xff]
    %v368 = vld [vmem:[#allocation3 + $0x168] sm:$0xff]
    %v369 = vld [vmem:[#allocation3 + $0x170] sm:$0xff]
    %v370 = vld [vmem:[#allocation3 + $0x178] sm:$0xff]
    %v371 = vld [vmem:[#allocation3 + $0x180] sm:$0xff]
    %v372 = vld [vmem:[#allocation3 + $0x188] sm:$0xff]
    %v373 = vld [vmem:[#allocation3 + $0x190] sm:$0xff]
    %v374 = vld [vmem:[#allocation3 + $0x198] sm:$0xff]
    %v375 = vld [vmem:[#allocation3 + $0x1a0] sm:$0xff]
    %v376 = vld [vmem:[#allocation3 + $0x1a8] sm:$0xff]
    %v377 = vld [vmem:[#allocation3 + $0x1b0] sm:$0xff]
    %v378 = vld [vmem:[#allocation3 + $0x1b8] sm:$0xff]
    %v379 = vld [vmem:[#allocation3 + $0x1c0] sm:$0xff]
    %v380 = vld [vmem:[#allocation3 + $0x1c8] sm:$0xff]
    %v381 = vld [vmem:[#allocation3 + $0x1d0] sm:$0xff]
    %v382 = vld [vmem:[#allocation3 + $0x1d8] sm:$0xff]
    %v383 = vld [vmem:[#allocation3 + $0x1e0] sm:$0xff]
    %v384 = vld [vmem:[#allocation3 + $0x1e8] sm:$0xff]
    %v385 = vld [vmem:[#allocation3 + $0x1f0] sm:$0xff]
    %v386 = vld [vmem:[#allocation3 + $0x1f8] sm:$0xff]
    %v387 = vld [vmem:[#allocation3 + $0x200] sm:$0xff]
    %v388 = vld [vmem:[#allocation3 + $0x208] sm:$0xff]
    %v389 = vld [vmem:[#allocation3 + $0x210] sm:$0xff]
    %v390 = vld [vmem:[#allocation3 + $0x218] sm:$0xff]
    %v391 = vld [vmem:[#allocation3 + $0x220] sm:$0xff]
    %v392 = vld [vmem:[#allocation3 + $0x228] sm:$0xff]
    %v393 = vld [vmem:[#allocation3 + $0x230] sm:$0xff]
    %v394 = vld [vmem:[#allocation3 + $0x238] sm:$0xff]
    %v395 = vld [vmem:[#allocation3 + $0x240] sm:$0xff]
    %v396 = vld [vmem:[#allocation3 + $0x248] sm:$0xff]
    %v397 = vld [vmem:[#allocation3 + $0x250] sm:$0xff]
    %v398 = vld [vmem:[#allocation3 + $0x258] sm:$0xff]
    %v399 = vld [vmem:[#allocation3 + $0x260] sm:$0xff]
    %v400 = vld [vmem:[#allocation3 + $0x268] sm:$0xff]
    %v401 = vld [vmem:[#allocation3 + $0x270] sm:$0xff]
    %v402 = vld [vmem:[#allocation3 + $0x278] sm:$0xff]
    %v403 = vld [vmem:[#allocation3 + $0x280] sm:$0xff]
    %v404 = vld [vmem:[#allocation3 + $0x288] sm:$0xff]
    %v405 = vld [vmem:[#allocation3 + $0x290] sm:$0xff]
    %v406 = vld [vmem:[#allocation3 + $0x298] sm:$0xff]
    %v407 = vld [vmem:[#allocation3 + $0x2a0] sm:$0xff]
    %v408 = vld [vmem:[#allocation3 + $0x2a8] sm:$0xff]
    %v409 = vld [vmem:[#allocation3 + $0x2b0] sm:$0xff]
    %v410 = vld [vmem:[#allocation3 + $0x2b8] sm:$0xff]
    %v411 = vld [vmem:[#allocation3 + $0x2c0] sm:$0xff]
    %v412 = vld [vmem:[#allocation3 + $0x2c8] sm:$0xff]
    %v413 = vld [vmem:[#allocation3 + $0x2d0] sm:$0xff]
    %v414 = vld [vmem:[#allocation3 + $0x2d8] sm:$0xff]
    %v415 = vld [vmem:[#allocation3 + $0x2e0] sm:$0xff]
    %v416 = vld [vmem:[#allocation3 + $0x2e8] sm:$0xff]
    %v417 = vld [vmem:[#allocation3 + $0x2f0] sm:$0xff]
    %v418 = vld [vmem:[#allocation3 + $0x2f8] sm:$0xff]
    %v419 = vld [vmem:[#allocation3 + $0x300] sm:$0xff]
    %v420 = vld [vmem:[#allocation3 + $0x308] sm:$0xff]
    %v421 = vld [vmem:[#allocation3 + $0x310] sm:$0xff]
    %v422 = vld [vmem:[#allocation3 + $0x318] sm:$0xff]
    %v423 = vld [vmem:[#allocation3 + $0x320] sm:$0xff]
    %v424 = vld [vmem:[#allocation3 + $0x328] sm:$0xff]
    %v425 = vld [vmem:[#allocation3 + $0x330] sm:$0xff]
    %v426 = vld [vmem:[#allocation3 + $0x338] sm:$0xff]
    %v427 = vld [vmem:[#allocation3 + $0x340] sm:$0xff]
    %v428 = vld [vmem:[#allocation3 + $0x348] sm:$0xff]
    %v429 = vld [vmem:[#allocation3 + $0x350] sm:$0xff]
    %v430 = vld [vmem:[#allocation3 + $0x358] sm:$0xff]
    %v431 = vld [vmem:[#allocation3 + $0x360] sm:$0xff]
    %v432 = vld [vmem:[#allocation3 + $0x368] sm:$0xff]
    %v433 = vld [vmem:[#allocation3 + $0x370] sm:$0xff]
    %v434 = vld [vmem:[#allocation3 + $0x378] sm:$0xff]
    %v435 = vld [vmem:[#allocation3 + $0x380] sm:$0xff]
    %v436 = vld [vmem:[#allocation3 + $0x388] sm:$0xff]
    %v437 = vld [vmem:[#allocation3 + $0x390] sm:$0xff]
    %v438 = vld [vmem:[#allocation3 + $0x398] sm:$0xff]
    %v439 = vld [vmem:[#allocation3 + $0x3a0] sm:$0xff]
    %v440 = vld [vmem:[#allocation3 + $0x3a8] sm:$0xff]
    %v441 = vld [vmem:[#allocation3 + $0x3b0] sm:$0xff]
    %v442 = vld [vmem:[#allocation3 + $0x3b8] sm:$0xff]
    %v443 = vld [vmem:[#allocation3 + $0x3c0] sm:$0xff]
    %v444 = vld [vmem:[#allocation3 + $0x3c8] sm:$0xff]
    %v445 = vld [vmem:[#allocation3 + $0x3d0] sm:$0xff]
    %v446 = vld [vmem:[#allocation3 + $0x3d8] sm:$0xff]
    %v447 = vld [vmem:[#allocation3 + $0x3e0] sm:$0xff]
    %v448 = vld [vmem:[#allocation3 + $0x3e8] sm:$0xff]
    %v449 = vld [vmem:[#allocation3 + $0x3f0] sm:$0xff]
    %v450 = vld [vmem:[#allocation3 + $0x3f8] sm:$0xff]
    %v451 = vld [vmem:[#allocation3 + $0x400] sm:$0xff]
    %v452 = vld [vmem:[#allocation3 + $0x408] sm:$0xff]
    %v453 = vld [vmem:[#allocation3 + $0x410] sm:$0xff]
    %v454 = vld [vmem:[#allocation3 + $0x418] sm:$0xff]
    %v455 = vld [vmem:[#allocation3 + $0x420] sm:$0xff]
    %v456 = vld [vmem:[#allocation3 + $0x428] sm:$0xff]
    %v457 = vld [vmem:[#allocation3 + $0x430] sm:$0xff]
    %v458 = vld [vmem:[#allocation3 + $0x438] sm:$0xff]
    %v459 = vld [vmem:[#allocation3 + $0x440] sm:$0xff]
    %v460 = vld [vmem:[#allocation3 + $0x448] sm:$0xff]
    %v461 = vld [vmem:[#allocation3 + $0x450] sm:$0xff]
    %v462 = vld [vmem:[#allocation3 + $0x458] sm:$0xff]
    %v463 = vld [vmem:[#allocation3 + $0x460] sm:$0xff]
    %v464 = vld [vmem:[#allocation3 + $0x468] sm:$0xff]
    %v465 = vld [vmem:[#allocation3 + $0x470] sm:$0xff]
    %v466 = vld [vmem:[#allocation3 + $0x478] sm:$0xff]
    %v467 = vld [vmem:[#allocation3 + $0x480] sm:$0xff]
    %v468 = vld [vmem:[#allocation3 + $0x488] sm:$0xff]
    %v469 = vld [vmem:[#allocation3 + $0x490] sm:$0xff]
    %v470 = vld [vmem:[#allocation3 + $0x498] sm:$0xff]
    %v471 = vld [vmem:[#allocation3 + $0x4a0] sm:$0xff]
    %v472 = vld [vmem:[#allocation3 + $0x4a8] sm:$0xff]
    %v473 = vld [vmem:[#allocation3 + $0x4b0] sm:$0xff]
    %v474 = vld [vmem:[#allocation3 + $0x4b8] sm:$0xff]
    %v475 = vld [vmem:[#allocation3 + $0x4c0] sm:$0xff]
    %v476 = vld [vmem:[#allocation3 + $0x4c8] sm:$0xff]
    %v477 = vld [vmem:[#allocation3 + $0x4d0] sm:$0xff]
    %v478 = vld [vmem:[#allocation3 + $0x4d8] sm:$0xff]
    %v479 = vld [vmem:[#allocation3 + $0x4e0] sm:$0xff]
    %v480 = vld [vmem:[#allocation3 + $0x4e8] sm:$0xff]
    %v481 = vld [vmem:[#allocation3 + $0x4f0] sm:$0xff]
    %v482 = vld [vmem:[#allocation3 + $0x4f8] sm:$0xff]
    %v483 = vld [vmem:[#allocation3 + $0x500] sm:$0xff]
    %v484 = vld [vmem:[#allocation3 + $0x508] sm:$0xff]
    %v485 = vld [vmem:[#allocation3 + $0x510] sm:$0xff]
    %v486 = vld [vmem:[#allocation3 + $0x518] sm:$0xff]
    %v487 = vld [vmem:[#allocation3 + $0x520] sm:$0xff]
    %v488 = vld [vmem:[#allocation3 + $0x528] sm:$0xff]
    %v489 = vld [vmem:[#allocation3 + $0x530] sm:$0xff]
    %v490 = vld [vmem:[#allocation3 + $0x538] sm:$0xff]
    %v491 = vld [vmem:[#allocation3 + $0x540] sm:$0xff]
    %v492 = vld [vmem:[#allocation3 + $0x548] sm:$0xff]
    %v493 = vld [vmem:[#allocation3 + $0x550] sm:$0xff]
    %v494 = vld [vmem:[#allocation3 + $0x558] sm:$0xff]
    %v495 = vld [vmem:[#allocation3 + $0x560] sm:$0xff]
    %v496 = vld [vmem:[#allocation3 + $0x568] sm:$0xff]
    %v497 = vld [vmem:[#allocation3 + $0x570] sm:$0xff]
    %v498 = vld [vmem:[#allocation3 + $0x578] sm:$0xff]
    %v499 = vld [vmem:[#allocation3 + $0x580] sm:$0xff]
    %v500 = vld [vmem:[#allocation3 + $0x588] sm:$0xff]
    %v501 = vld [vmem:[#allocation3 + $0x590] sm:$0xff]
    %v502 = vld [vmem:[#allocation3 + $0x598] sm:$0xff]
    %v503 = vld [vmem:[#allocation3 + $0x5a0] sm:$0xff]
    %v504 = vld [vmem:[#allocation3 + $0x5a8] sm:$0xff]
    %v505 = vld [vmem:[#allocation3 + $0x5b0] sm:$0xff]
    %v506 = vld [vmem:[#allocation3 + $0x5b8] sm:$0xff]
    %v507 = vld [vmem:[#allocation3 + $0x5c0] sm:$0xff]
    %v508 = vld [vmem:[#allocation3 + $0x5c8] sm:$0xff]
    %v509 = vld [vmem:[#allocation3 + $0x5d0] sm:$0xff]
    %v510 = vld [vmem:[#allocation3 + $0x5d8] sm:$0xff]
    %v511 = vld [vmem:[#allocation3 + $0x5e0] sm:$0xff]
    %v512 = vld [vmem:[#allocation3 + $0x5e8] sm:$0xff]
    %v513 = vld [vmem:[#allocation3 + $0x5f0] sm:$0xff]
    %v514 = vld [vmem:[#allocation3 + $0x5f8] sm:$0xff]
    %v515 = vld [vmem:[#allocation3 + $0x600] sm:$0xff]
    %v516 = vld [vmem:[#allocation3 + $0x608] sm:$0xff]
    %v517 = vld [vmem:[#allocation3 + $0x610] sm:$0xff]
    %v518 = vld [vmem:[#allocation3 + $0x618] sm:$0xff]
    %v519 = vld [vmem:[#allocation3 + $0x620] sm:$0xff]
    %v520 = vld [vmem:[#allocation3 + $0x628] sm:$0xff]
    %v521 = vld [vmem:[#allocation3 + $0x630] sm:$0xff]
    %v522 = vld [vmem:[#allocation3 + $0x638] sm:$0xff]
    %v523 = vld [vmem:[#allocation3 + $0x640] sm:$0xff]
    %v524 = vld [vmem:[#allocation3 + $0x648] sm:$0xff]
    %v525 = vld [vmem:[#allocation3 + $0x650] sm:$0xff]
    %v526 = vld [vmem:[#allocation3 + $0x658] sm:$0xff]
    %v527 = vld [vmem:[#allocation3 + $0x660] sm:$0xff]
    %v528 = vld [vmem:[#allocation3 + $0x668] sm:$0xff]
    %v529 = vld [vmem:[#allocation3 + $0x670] sm:$0xff]
    %v530 = vld [vmem:[#allocation3 + $0x678] sm:$0xff]
    %v531 = vld [vmem:[#allocation3 + $0x680] sm:$0xff]
    %v532 = vld [vmem:[#allocation3 + $0x688] sm:$0xff]
    %v533 = vld [vmem:[#allocation3 + $0x690] sm:$0xff]
    %v534 = vld [vmem:[#allocation3 + $0x698] sm:$0xff]
    %v535 = vld [vmem:[#allocation3 + $0x6a0] sm:$0xff]
    %v536 = vld [vmem:[#allocation3 + $0x6a8] sm:$0xff]
    %v537 = vld [vmem:[#allocation3 + $0x6b0] sm:$0xff]
    %v538 = vld [vmem:[#allocation3 + $0x6b8] sm:$0xff]
    %v539 = vld [vmem:[#allocation3 + $0x6c0] sm:$0xff]
    %v540 = vld [vmem:[#allocation3 + $0x6c8] sm:$0xff]
    %v541 = vld [vmem:[#allocation3 + $0x6d0] sm:$0xff]
    %v542 = vld [vmem:[#allocation3 + $0x6d8] sm:$0xff]
    %v543 = vld [vmem:[#allocation3 + $0x6e0] sm:$0xff]
    %v544 = vld [vmem:[#allocation3 + $0x6e8] sm:$0xff]
    %v545 = vld [vmem:[#allocation3 + $0x6f0] sm:$0xff]
    %v546 = vld [vmem:[#allocation3 + $0x6f8] sm:$0xff]
    %v547 = vld [vmem:[#allocation3 + $0x700] sm:$0xff]
    %v548 = vld [vmem:[#allocation3 + $0x708] sm:$0xff]
    %v549 = vld [vmem:[#allocation3 + $0x710] sm:$0xff]
    %v550 = vld [vmem:[#allocation3 + $0x718] sm:$0xff]
    %v551 = vld [vmem:[#allocation3 + $0x720] sm:$0xff]
    %v552 = vld [vmem:[#allocation3 + $0x728] sm:$0xff]
    %v553 = vld [vmem:[#allocation3 + $0x730] sm:$0xff]
    %v554 = vld [vmem:[#allocation3 + $0x738] sm:$0xff]
    %v555 = vld [vmem:[#allocation3 + $0x740] sm:$0xff]
    %v556 = vld [vmem:[#allocation3 + $0x748] sm:$0xff]
    %v557 = vld [vmem:[#allocation3 + $0x750] sm:$0xff]
    %v558 = vld [vmem:[#allocation3 + $0x758] sm:$0xff]
    %v559 = vld [vmem:[#allocation3 + $0x760] sm:$0xff]
    %v560 = vld [vmem:[#allocation3 + $0x768] sm:$0xff]
    %v561 = vld [vmem:[#allocation3 + $0x770] sm:$0xff]
    %v562 = vld [vmem:[#allocation3 + $0x778] sm:$0xff]
    %v563 = vld [vmem:[#allocation3 + $0x780] sm:$0xff]
    %v564 = vld [vmem:[#allocation3 + $0x788] sm:$0xff]
    %v565 = vld [vmem:[#allocation3 + $0x790] sm:$0xff]
    %v566 = vld [vmem:[#allocation3 + $0x798] sm:$0xff]
    %v567 = vld [vmem:[#allocation3 + $0x7a0] sm:$0xff]
    %v568 = vld [vmem:[#allocation3 + $0x7a8] sm:$0xff]
    %v569 = vld [vmem:[#allocation3 + $0x7b0] sm:$0xff]
    %v570 = vld [vmem:[#allocation3 + $0x7b8] sm:$0xff]
    %v571 = vld [vmem:[#allocation3 + $0x7c0] sm:$0xff]
    %v572 = vld [vmem:[#allocation3 + $0x7c8] sm:$0xff]
    %v573 = vld [vmem:[#allocation3 + $0x7d0] sm:$0xff]
    %v574 = vld [vmem:[#allocation3 + $0x7d8] sm:$0xff]
    %v575 = vld [vmem:[#allocation3 + $0x7e0] sm:$0xff]
    %v576 = vld [vmem:[#allocation3 + $0x7e8] sm:$0xff]
    %v577 = vld [vmem:[#allocation3 + $0x7f0] sm:$0xff]
    %v578 = vld [vmem:[#allocation3 + $0x7f8] sm:$0xff]
    %v579 = vld [vmem:[%s4] sm:$0xf]
    %v581 = vlaneseq
    %v582 = vshrl.u32 %v581, 7
    %v583 = vsub.s32 0, %v582
    %v584 = vrot.slane %v579, %v583
    %v585 = vlaneseq
    %v586 = vshrl.u32 %v585, 7
    %v587 = vsub.s32 1, %v586
    %v588 = vrot.slane %v579, %v587
    %v589 = vlaneseq
    %v590 = vshrl.u32 %v589, 7
    %v591 = vsub.s32 2, %v590
    %v592 = vrot.slane %v579, %v591
    %v593 = vlaneseq
    %v594 = vshrl.u32 %v593, 7
    %v595 = vsub.s32 3, %v594
    %v596 = vrot.slane %v579, %v595
    %601 = vmatprep.subr.mxu0 %v384
    %602 = vmatpush1.msra.mxu0 %v383
    %603 = vmatprep.subr.mxu0 %v380
    %604 = vmatpush1.msra.mxu0 %v379
    %605 = vmatprep.subr.mxu0 %v376
    %606 = vmatpush1.msra.mxu0 %v375
    %607 = vmatprep.subr.mxu0 %v372
    %608 = vmatpush1.msra.mxu0 %v371
    %609 = vmatprep.subr.mxu0 %v368
    %610 = vmatpush1.msra.mxu0 %v367
    %611 = vmatprep.subr.mxu0 %v364
    %612 = vmatpush1.msra.mxu0 %v363
    %613 = vmatprep.subr.mxu0 %v360
    %614 = vmatpush1.msra.mxu0 %v359
    %615 = vmatprep.subr.mxu0 %v356
    %616 = vmatpush1.msra.mxu0 %v355
    %617 = vmatprep.subr.mxu0 %v352
    %618 = vmatpush1.msra.mxu0 %v351
    %619 = vmatprep.subr.mxu0 %v348
    %620 = vmatpush1.msra.mxu0 %v347
    %621 = vmatprep.subr.mxu0 %v344
    %622 = vmatpush1.msra.mxu0 %v343
    %623 = vmatprep.subr.mxu0 %v340
    %624 = vmatpush1.msra.mxu0 %v339
    %625 = vmatprep.subr.mxu0 %v336
    %626 = vmatpush1.msra.mxu0 %v335
    %627 = vmatprep.subr.mxu0 %v332
    %628 = vmatpush1.msra.mxu0 %v331
    %629 = vmatprep.subr.mxu0 %v328
    %630 = vmatpush1.msra.mxu0 %v327
    %631 = vmatprep.subr.mxu0 %v324
    %632 = vmatpush1.msra.mxu0 %v323
    %633 = vmatprep.subr.mxu0 %v448
    %634 = vmatpush2.msra.mxu0 %v447
    %635 = vmatprep.subr.mxu0 %v444
    %636 = vmatpush2.msra.mxu0 %v443
    %637 = vmatprep.subr.mxu0 %v440
    %638 = vmatpush2.msra.mxu0 %v439
    %639 = vmatprep.subr.mxu0 %v436
    %640 = vmatpush2.msra.mxu0 %v435
    %641 = vmatprep.subr.mxu0 %v432
    %642 = vmatpush2.msra.mxu0 %v431
    %643 = vmatprep.subr.mxu0 %v428
    %644 = vmatpush2.msra.mxu0 %v427
    %645 = vmatprep.subr.mxu0 %v424
    %646 = vmatpush2.msra.mxu0 %v423
    %647 = vmatprep.subr.mxu0 %v420
    %648 = vmatpush2.msra.mxu0 %v419
    %649 = vmatprep.subr.mxu0 %v416
    %650 = vmatpush2.msra.mxu0 %v415
    %651 = vmatprep.subr.mxu0 %v412
    %652 = vmatpush2.msra.mxu0 %v411
    %653 = vmatprep.subr.mxu0 %v408
    %654 = vmatpush2.msra.mxu0 %v407
    %655 = vmatprep.subr.mxu0 %v404
    %656 = vmatpush2.msra.mxu0 %v403
    %657 = vmatprep.subr.mxu0 %v400
    %658 = vmatpush2.msra.mxu0 %v399
    %659 = vmatprep.subr.mxu0 %v396
    %660 = vmatpush2.msra.mxu0 %v395
    %661 = vmatprep.subr.mxu0 %v392
    %662 = vmatpush2.msra.mxu0 %v391
    %663 = vmatprep.subr.mxu0 %v388
    %664 = vmatpush2.msra.mxu0 %v387
    %665 = vmatprep.mubr.f32.mxu0 %v320
    %666 = vmatmul.mubr.f32.gmra.mxu0 %v319
    %v667 = vpop.f32.mrf.mxu0
    %v668 = vadd.f32 %v584, %v667
    %v669 = vpop.f32.mrf.mxu0
    %v670 = vadd.f32 %v588, %v669
    %671 = vdwg.mxu0
    %672 = vmatprep.subr.mxu0 %v512
    %673 = vmatpush1.msra.mxu0 %v511
    %674 = vmatprep.subr.mxu0 %v508
    %675 = vmatpush1.msra.mxu0 %v507
    %676 = vmatprep.subr.mxu0 %v504
    %677 = vmatpush1.msra.mxu0 %v503
    %678 = vmatprep.subr.mxu0 %v500
    %679 = vmatpush1.msra.mxu0 %v499
    %680 = vmatprep.subr.mxu0 %v496
    %681 = vmatpush1.msra.mxu0 %v495
    %682 = vmatprep.subr.mxu0 %v492
    %683 = vmatpush1.msra.mxu0 %v491
    %684 = vmatprep.subr.mxu0 %v488
    %685 = vmatpush1.msra.mxu0 %v487
    %686 = vmatprep.subr.mxu0 %v484
    %687 = vmatpush1.msra.mxu0 %v483
    %688 = vmatprep.subr.mxu0 %v480
    %689 = vmatpush1.msra.mxu0 %v479
    %690 = vmatprep.subr.mxu0 %v476
    %691 = vmatpush1.msra.mxu0 %v475
    %692 = vmatprep.subr.mxu0 %v472
    %693 = vmatpush1.msra.mxu0 %v471
    %694 = vmatprep.subr.mxu0 %v468
    %695 = vmatpush1.msra.mxu0 %v467
    %696 = vmatprep.subr.mxu0 %v464
    %697 = vmatpush1.msra.mxu0 %v463
    %698 = vmatprep.subr.mxu0 %v460
    %699 = vmatpush1.msra.mxu0 %v459
    %700 = vmatprep.subr.mxu0 %v456
    %701 = vmatpush1.msra.mxu0 %v455
    %702 = vmatprep.subr.mxu0 %v452
    %703 = vmatpush1.msra.mxu0 %v451
    %704 = vmatprep.subr.mxu0 %v576
    %705 = vmatpush2.msra.mxu0 %v575
    %706 = vmatprep.subr.mxu0 %v572
    %707 = vmatpush2.msra.mxu0 %v571
    %708 = vmatprep.subr.mxu0 %v568
    %709 = vmatpush2.msra.mxu0 %v567
    %710 = vmatprep.subr.mxu0 %v564
    %711 = vmatpush2.msra.mxu0 %v563
    %712 = vmatprep.subr.mxu0 %v560
    %713 = vmatpush2.msra.mxu0 %v559
    %714 = vmatprep.subr.mxu0 %v556
    %715 = vmatpush2.msra.mxu0 %v555
    %716 = vmatprep.subr.mxu0 %v552
    %717 = vmatpush2.msra.mxu0 %v551
    %718 = vmatprep.subr.mxu0 %v548
    %719 = vmatpush2.msra.mxu0 %v547
    %720 = vmatprep.subr.mxu0 %v544
    %721 = vmatpush2.msra.mxu0 %v543
    %722 = vmatprep.subr.mxu0 %v540
    %723 = vmatpush2.msra.mxu0 %v539
    %724 = vmatprep.subr.mxu0 %v536
    %725 = vmatpush2.msra.mxu0 %v535
    %726 = vmatprep.subr.mxu0 %v532
    %727 = vmatpush2.msra.mxu0 %v531
    %728 = vmatprep.subr.mxu0 %v528
    %729 = vmatpush2.msra.mxu0 %v527
    %730 = vmatprep.subr.mxu0 %v524
    %731 = vmatpush2.msra.mxu0 %v523
    %732 = vmatprep.subr.mxu0 %v520
    %733 = vmatpush2.msra.mxu0 %v519
    %734 = vmatprep.subr.mxu0 %v516
    %735 = vmatpush2.msra.mxu0 %v515
    %736 = vmatprep.mubr.f32.mxu0 %v322
    %737 = vmatmul.mubr.f32.gmra.mxu0 %v321
    %v738 = vpop.f32.mrf.mxu0
    %v739 = vadd.f32 %v668, %v738
    %v740 = vpop.f32.mrf.mxu0
    %v741 = vadd.f32 %v670, %v740
    %742 = vdwg.mxu0
    %743 = vmatprep.subr.mxu0 %v386
    %744 = vmatpush1.msra.mxu0 %v385
    %745 = vmatprep.subr.mxu0 %v382
    %746 = vmatpush1.msra.mxu0 %v381
    %747 = vmatprep.subr.mxu0 %v378
    %748 = vmatpush1.msra.mxu0 %v377
    %749 = vmatprep.subr.mxu0 %v374
    %750 = vmatpush1.msra.mxu0 %v373
    %751 = vmatprep.subr.mxu0 %v370
    %752 = vmatpush1.msra.mxu0 %v369
    %753 = vmatprep.subr.mxu0 %v366
    %754 = vmatpush1.msra.mxu0 %v365
    %755 = vmatprep.subr.mxu0 %v362
    %756 = vmatpush1.msra.mxu0 %v361
    %757 = vmatprep.subr.mxu0 %v358
    %758 = vmatpush1.msra.mxu0 %v357
    %759 = vmatprep.subr.mxu0 %v354
    %760 = vmatpush1.msra.mxu0 %v353
    %761 = vmatprep.subr.mxu0 %v350
    %762 = vmatpush1.msra.mxu0 %v349
    %763 = vmatprep.subr.mxu0 %v346
    %764 = vmatpush1.msra.mxu0 %v345
    %765 = vmatprep.subr.mxu0 %v342
    %766 = vmatpush1.msra.mxu0 %v341
    %767 = vmatprep.subr.mxu0 %v338
    %768 = vmatpush1.msra.mxu0 %v337
    %769 = vmatprep.subr.mxu0 %v334
    %770 = vmatpush1.msra.mxu0 %v333
    %771 = vmatprep.subr.mxu0 %v330
    %772 = vmatpush1.msra.mxu0 %v329
    %773 = vmatprep.subr.mxu0 %v326
    %774 = vmatpush1.msra.mxu0 %v325
    %775 = vmatprep.subr.mxu0 %v450
    %776 = vmatpush2.msra.mxu0 %v449
    %777 = vmatprep.subr.mxu0 %v446
    %778 = vmatpush2.msra.mxu0 %v445
    %779 = vmatprep.subr.mxu0 %v442
    %780 = vmatpush2.msra.mxu0 %v441
    %781 = vmatprep.subr.mxu0 %v438
    %782 = vmatpush2.msra.mxu0 %v437
    %783 = vmatprep.subr.mxu0 %v434
    %784 = vmatpush2.msra.mxu0 %v433
    %785 = vmatprep.subr.mxu0 %v430
    %786 = vmatpush2.msra.mxu0 %v429
    %787 = vmatprep.subr.mxu0 %v426
    %788 = vmatpush2.msra.mxu0 %v425
    %789 = vmatprep.subr.mxu0 %v422
    %790 = vmatpush2.msra.mxu0 %v421
    %791 = vmatprep.subr.mxu0 %v418
    %792 = vmatpush2.msra.mxu0 %v417
    %793 = vmatprep.subr.mxu0 %v414
    %794 = vmatpush2.msra.mxu0 %v413
    %795 = vmatprep.subr.mxu0 %v410
    %796 = vmatpush2.msra.mxu0 %v409
    %797 = vmatprep.subr.mxu0 %v406
    %798 = vmatpush2.msra.mxu0 %v405
    %799 = vmatprep.subr.mxu0 %v402
    %800 = vmatpush2.msra.mxu0 %v401
    %801 = vmatprep.subr.mxu0 %v398
    %802 = vmatpush2.msra.mxu0 %v397
    %803 = vmatprep.subr.mxu0 %v394
    %804 = vmatpush2.msra.mxu0 %v393
    %805 = vmatprep.subr.mxu0 %v390
    %806 = vmatpush2.msra.mxu0 %v389
    %807 = vmatprep.mubr.f32.mxu0 %v320
    %808 = vmatmul.mubr.f32.gmra.mxu0 %v319
    %v809 = vpop.f32.mrf.mxu0
    %v810 = vadd.f32 %v592, %v809
    %v811 = vpop.f32.mrf.mxu0
    %v812 = vadd.f32 %v596, %v811
    %813 = vdwg.mxu0
    %814 = vmatprep.subr.mxu0 %v514
    %815 = vmatpush1.msra.mxu0 %v513
    %816 = vmatprep.subr.mxu0 %v510
    %817 = vmatpush1.msra.mxu0 %v509
    %818 = vmatprep.subr.mxu0 %v506
    %819 = vmatpush1.msra.mxu0 %v505
    %820 = vmatprep.subr.mxu0 %v502
    %821 = vmatpush1.msra.mxu0 %v501
    %822 = vmatprep.subr.mxu0 %v498
    %823 = vmatpush1.msra.mxu0 %v497
    %824 = vmatprep.subr.mxu0 %v494
    %825 = vmatpush1.msra.mxu0 %v493
    %826 = vmatprep.subr.mxu0 %v490
    %827 = vmatpush1.msra.mxu0 %v489
    %828 = vmatprep.subr.mxu0 %v486
    %829 = vmatpush1.msra.mxu0 %v485
    %830 = vmatprep.subr.mxu0 %v482
    %831 = vmatpush1.msra.mxu0 %v481
    %832 = vmatprep.subr.mxu0 %v478
    %833 = vmatpush1.msra.mxu0 %v477
    %834 = vmatprep.subr.mxu0 %v474
    %835 = vmatpush1.msra.mxu0 %v473
    %836 = vmatprep.subr.mxu0 %v470
    %837 = vmatpush1.msra.mxu0 %v469
    %838 = vmatprep.subr.mxu0 %v466
    %839 = vmatpush1.msra.mxu0 %v465
    %840 = vmatprep.subr.mxu0 %v462
    %841 = vmatpush1.msra.mxu0 %v461
    %842 = vmatprep.subr.mxu0 %v458
    %843 = vmatpush1.msra.mxu0 %v457
    %844 = vmatprep.subr.mxu0 %v454
    %845 = vmatpush1.msra.mxu0 %v453
    %846 = vmatprep.subr.mxu0 %v578
    %847 = vmatpush2.msra.mxu0 %v577
    %848 = vmatprep.subr.mxu0 %v574
    %849 = vmatpush2.msra.mxu0 %v573
    %850 = vmatprep.subr.mxu0 %v570
    %851 = vmatpush2.msra.mxu0 %v569
    %852 = vmatprep.subr.mxu0 %v566
    %853 = vmatpush2.msra.mxu0 %v565
    %854 = vmatprep.subr.mxu0 %v562
    %855 = vmatpush2.msra.mxu0 %v561
    %856 = vmatprep.subr.mxu0 %v558
    %857 = vmatpush2.msra.mxu0 %v557
    %858 = vmatprep.subr.mxu0 %v554
    %859 = vmatpush2.msra.mxu0 %v553
    %860 = vmatprep.subr.mxu0 %v550
    %861 = vmatpush2.msra.mxu0 %v549
    %862 = vmatprep.subr.mxu0 %v546
    %863 = vmatpush2.msra.mxu0 %v545
    %864 = vmatprep.subr.mxu0 %v542
    %865 = vmatpush2.msra.mxu0 %v541
    %866 = vmatprep.subr.mxu0 %v538
    %867 = vmatpush2.msra.mxu0 %v537
    %868 = vmatprep.subr.mxu0 %v534
    %869 = vmatpush2.msra.mxu0 %v533
    %870 = vmatprep.subr.mxu0 %v530
    %871 = vmatpush2.msra.mxu0 %v529
    %872 = vmatprep.subr.mxu0 %v526
    %873 = vmatpush2.msra.mxu0 %v525
    %874 = vmatprep.subr.mxu0 %v522
    %875 = vmatpush2.msra.mxu0 %v521
    %876 = vmatprep.subr.mxu0 %v518
    %877 = vmatpush2.msra.mxu0 %v517
    %878 = vmatprep.mubr.f32.mxu0 %v322
    %879 = vmatmul.mubr.f32.gmra.mxu0 %v321
    %v880 = vpop.f32.mrf.mxu0
    %v881 = vadd.f32 %v810, %v880
    %v882 = vpop.f32.mrf.mxu0
    %v883 = vadd.f32 %v812, %v882
    %884 = vdwg.mxu0
    %v885 = vmax.f32 %v739, 0.0
    %v886 = vmax.f32 %v741, 0.0
    %v887 = vmax.f32 %v881, 0.0
    %v888 = vmax.f32 %v883, 0.0
    %v889 = vld [vmem:[%s5] sm:$0xff]
    %v890 = vld [vmem:[%s5 + $0x8] sm:$0xff]
    %v891 = vld [vmem:[%s5 + $0x10] sm:$0xff]
    %v892 = vld [vmem:[%s5 + $0x18] sm:$0xff]
    %v893 = vld [vmem:[%s5 + $0x20] sm:$0xff]
    %v894 = vld [vmem:[%s5 + $0x28] sm:$0xff]
    %v895 = vld [vmem:[%s5 + $0x30] sm:$0xff]
    %v896 = vld [vmem:[%s5 + $0x38] sm:$0xff]
    %v897 = vld [vmem:[%s5 + $0x40] sm:$0xff]
    %v898 = vld [vmem:[%s5 + $0x48] sm:$0xff]
    %v899 = vld [vmem:[%s5 + $0x50] sm:$0xff]
    %v900 = vld [vmem:[%s5 + $0x58] sm:$0xff]
    %v901 = vld [vmem:[%s5 + $0x60] sm:$0xff]
    %v902 = vld [vmem:[%s5 + $0x68] sm:$0xff]
    %v903 = vld [vmem:[%s5 + $0x70] sm:$0xff]
    %v904 = vld [vmem:[%s5 + $0x78] sm:$0xff]
    %v905 = vld [vmem:[%s5 + $0x80] sm:$0xff]
    %v906 = vld [vmem:[%s5 + $0x88] sm:$0xff]
    %v907 = vld [vmem:[%s5 + $0x90] sm:$0xff]
    %v908 = vld [vmem:[%s5 + $0x98] sm:$0xff]
    %v909 = vld [vmem:[%s5 + $0xa0] sm:$0xff]
    %v910 = vld [vmem:[%s5 + $0xa8] sm:$0xff]
    %v911 = vld [vmem:[%s5 + $0xb0] sm:$0xff]
    %v912 = vld [vmem:[%s5 + $0xb8] sm:$0xff]
    %v913 = vld [vmem:[%s6] sm:$0xff]
    %v914 = vld [vmem:[%s6 + $0x8] sm:$0xff]
    %v915 = vld [vmem:[%s6 + $0x10] sm:$0xff]
    %v916 = vld [vmem:[%s6 + $0x18] sm:$0xff]
    %v917 = vld [vmem:[%s6 + $0x20] sm:$0xff]
    %v918 = vld [vmem:[%s6 + $0x28] sm:$0xff]
    %v919 = vld [vmem:[%s6 + $0x30] sm:$0xff]
    %v920 = vld [vmem:[%s6 + $0x38] sm:$0xff]
    %v921 = vld [vmem:[%s6 + $0x40] sm:$0xff]
    %v922 = vld [vmem:[%s6 + $0x48] sm:$0xff]
    %v923 = vld [vmem:[%s6 + $0x50] sm:$0xff]
    %v924 = vld [vmem:[%s6 + $0x58] sm:$0xff]
    %v925 = vld [vmem:[%s6 + $0x60] sm:$0xff]
    %v926 = vld [vmem:[%s6 + $0x68] sm:$0xff]
    %v927 = vld [vmem:[%s6 + $0x70] sm:$0xff]
    %v928 = vld [vmem:[%s6 + $0x78] sm:$0xff]
    %v929 = vld [vmem:[%s6 + $0x80] sm:$0xff]
    %v930 = vld [vmem:[%s6 + $0x88] sm:$0xff]
    %v931 = vld [vmem:[%s6 + $0x90] sm:$0xff]
    %v932 = vld [vmem:[%s6 + $0x98] sm:$0xff]
    %v933 = vld [vmem:[%s6 + $0xa0] sm:$0xff]
    %v934 = vld [vmem:[%s6 + $0xa8] sm:$0xff]
    %v935 = vld [vmem:[%s6 + $0xb0] sm:$0xff]
    %v936 = vld [vmem:[%s6 + $0xb8] sm:$0xff]
    %v937 = vld [vmem:[%s6 + $0xc0] sm:$0xff]
    %v938 = vld [vmem:[%s6 + $0xc8] sm:$0xff]
    %v939 = vld [vmem:[%s6 + $0xd0] sm:$0xff]
    %v940 = vld [vmem:[%s6 + $0xd8] sm:$0xff]
    %v941 = vld [vmem:[%s6 + $0xe0] sm:$0xff]
    %v942 = vld [vmem:[%s6 + $0xe8] sm:$0xff]
    %v943 = vld [vmem:[%s6 + $0xf0] sm:$0xff]
    %v944 = vld [vmem:[%s6 + $0xf8] sm:$0xff]
    %v945 = vld [vmem:[%s6 + $0x100] sm:$0xff]
    %v946 = vld [vmem:[%s6 + $0x108] sm:$0xff]
    %v947 = vld [vmem:[%s6 + $0x110] sm:$0xff]
    %v948 = vld [vmem:[%s6 + $0x118] sm:$0xff]
    %v949 = vld [vmem:[%s6 + $0x120] sm:$0xff]
    %v950 = vld [vmem:[%s6 + $0x128] sm:$0xff]
    %v951 = vld [vmem:[%s6 + $0x130] sm:$0xff]
    %v952 = vld [vmem:[%s6 + $0x138] sm:$0xff]
    %v953 = vld [vmem:[%s6 + $0x140] sm:$0xff]
    %v954 = vld [vmem:[%s6 + $0x148] sm:$0xff]
    %v955 = vld [vmem:[%s6 + $0x150] sm:$0xff]
    %v956 = vld [vmem:[%s6 + $0x158] sm:$0xff]
    %v957 = vld [vmem:[%s6 + $0x160] sm:$0xff]
    %v958 = vld [vmem:[%s6 + $0x168] sm:$0xff]
    %v959 = vld [vmem:[%s6 + $0x170] sm:$0xff]
    %v960 = vld [vmem:[%s6 + $0x178] sm:$0xff]
    %v961 = vld [vmem:[%s6 + $0x180] sm:$0xff]
    %v962 = vld [vmem:[%s6 + $0x188] sm:$0xff]
    %v963 = vld [vmem:[%s6 + $0x190] sm:$0xff]
    %v964 = vld [vmem:[%s6 + $0x198] sm:$0xff]
    %v965 = vld [vmem:[%s6 + $0x1a0] sm:$0xff]
    %v966 = vld [vmem:[%s6 + $0x1a8] sm:$0xff]
    %v967 = vld [vmem:[%s6 + $0x1b0] sm:$0xff]
    %v968 = vld [vmem:[%s6 + $0x1b8] sm:$0xff]
    %v969 = vld [vmem:[%s6 + $0x1c0] sm:$0xff]
    %v970 = vld [vmem:[%s6 + $0x1c8] sm:$0xff]
    %v971 = vld [vmem:[%s6 + $0x1d0] sm:$0xff]
    %v972 = vld [vmem:[%s6 + $0x1d8] sm:$0xff]
    %v973 = vld [vmem:[%s6 + $0x1e0] sm:$0xff]
    %v974 = vld [vmem:[%s6 + $0x1e8] sm:$0xff]
    %v975 = vld [vmem:[%s6 + $0x1f0] sm:$0xff]
    %v976 = vld [vmem:[%s6 + $0x1f8] sm:$0xff]
    %977 = vmatprep.subr.mxu0 0.0
    %978 = vmatpush1.msra.mxu0 %v928
    %979 = vmatprep.subr.mxu0 0.0
    %980 = vmatpush1.msra.mxu0 %v927
    %981 = vmatprep.subr.mxu0 0.0
    %982 = vmatpush1.msra.mxu0 %v926
    %983 = vmatprep.subr.mxu0 0.0
    %984 = vmatpush1.msra.mxu0 %v925
    %985 = vmatprep.subr.mxu0 0.0
    %986 = vmatpush1.msra.mxu0 %v924
    %987 = vmatprep.subr.mxu0 0.0
    %988 = vmatpush1.msra.mxu0 %v923
    %989 = vmatprep.subr.mxu0 0.0
    %990 = vmatpush1.msra.mxu0 %v922
    %991 = vmatprep.subr.mxu0 0.0
    %992 = vmatpush1.msra.mxu0 %v921
    %993 = vmatprep.subr.mxu0 0.0
    %994 = vmatpush1.msra.mxu0 %v920
    %995 = vmatprep.subr.mxu0 0.0
    %996 = vmatpush1.msra.mxu0 %v919
    %997 = vmatprep.subr.mxu0 0.0
    %998 = vmatpush1.msra.mxu0 %v918
    %999 = vmatprep.subr.mxu0 0.0
    %1000 = vmatpush1.msra.mxu0 %v917
    %1001 = vmatprep.subr.mxu0 0.0
    %1002 = vmatpush1.msra.mxu0 %v916
    %1003 = vmatprep.subr.mxu0 0.0
    %1004 = vmatpush1.msra.mxu0 %v915
    %1005 = vmatprep.subr.mxu0 0.0
    %1006 = vmatpush1.msra.mxu0 %v914
    %1007 = vmatprep.subr.mxu0 0.0
    %1008 = vmatpush1.msra.mxu0 %v913
    %1009 = vmatprep.subr.mxu0 0.0
    %1010 = vmatpush2.msra.mxu0 %v944
    %1011 = vmatprep.subr.mxu0 0.0
    %1012 = vmatpush2.msra.mxu0 %v943
    %1013 = vmatprep.subr.mxu0 0.0
    %1014 = vmatpush2.msra.mxu0 %v942
    %1015 = vmatprep.subr.mxu0 0.0
    %1016 = vmatpush2.msra.mxu0 %v941
    %1017 = vmatprep.subr.mxu0 0.0
    %1018 = vmatpush2.msra.mxu0 %v940
    %1019 = vmatprep.subr.mxu0 0.0
    %1020 = vmatpush2.msra.mxu0 %v939
    %1021 = vmatprep.subr.mxu0 0.0
    %1022 = vmatpush2.msra.mxu0 %v938
    %1023 = vmatprep.subr.mxu0 0.0
    %1024 = vmatpush2.msra.mxu0 %v937
    %1025 = vmatprep.subr.mxu0 0.0
    %1026 = vmatpush2.msra.mxu0 %v936
    %1027 = vmatprep.subr.mxu0 0.0
    %1028 = vmatpush2.msra.mxu0 %v935
    %1029 = vmatprep.subr.mxu0 0.0
    %1030 = vmatpush2.msra.mxu0 %v934
    %1031 = vmatprep.subr.mxu0 0.0
    %1032 = vmatpush2.msra.mxu0 %v933
    %1033 = vmatprep.subr.mxu0 0.0
    %1034 = vmatpush2.msra.mxu0 %v932
    %1035 = vmatprep.subr.mxu0 0.0
    %1036 = vmatpush2.msra.mxu0 %v931
    %1037 = vmatprep.subr.mxu0 0.0
    %1038 = vmatpush2.msra.mxu0 %v930
    %1039 = vmatprep.subr.mxu0 0.0
    %1040 = vmatpush2.msra.mxu0 %v929
    %1041 = vmatprep.mubr.f32.mxu0 %v886
    %1042 = vmatmul.mubr.f32.gmra.mxu0 %v885
    %v1043 = vpop.f32.mrf.mxu0
    %v1044 = vadd.f32 0.0, %v1043
    %v1045 = vpop.f32.mrf.mxu0
    %1046 = vdwg.mxu0
    %1047 = vmatprep.subr.mxu0 0.0
    %1048 = vmatpush1.msra.mxu0 %v960
    %1049 = vmatprep.subr.mxu0 0.0
    %1050 = vmatpush1.msra.mxu0 %v959
    %1051 = vmatprep.subr.mxu0 0.0
    %1052 = vmatpush1.msra.mxu0 %v958
    %1053 = vmatprep.subr.mxu0 0.0
    %1054 = vmatpush1.msra.mxu0 %v957
    %1055 = vmatprep.subr.mxu0 0.0
    %1056 = vmatpush1.msra.mxu0 %v956
    %1057 = vmatprep.subr.mxu0 0.0
    %1058 = vmatpush1.msra.mxu0 %v955
    %1059 = vmatprep.subr.mxu0 0.0
    %1060 = vmatpush1.msra.mxu0 %v954
    %1061 = vmatprep.subr.mxu0 0.0
    %1062 = vmatpush1.msra.mxu0 %v953
    %1063 = vmatprep.subr.mxu0 0.0
    %1064 = vmatpush1.msra.mxu0 %v952
    %1065 = vmatprep.subr.mxu0 0.0
    %1066 = vmatpush1.msra.mxu0 %v951
    %1067 = vmatprep.subr.mxu0 0.0
    %1068 = vmatpush1.msra.mxu0 %v950
    %1069 = vmatprep.subr.mxu0 0.0
    %1070 = vmatpush1.msra.mxu0 %v949
    %1071 = vmatprep.subr.mxu0 0.0
    %1072 = vmatpush1.msra.mxu0 %v948
    %1073 = vmatprep.subr.mxu0 0.0
    %1074 = vmatpush1.msra.mxu0 %v947
    %1075 = vmatprep.subr.mxu0 0.0
    %1076 = vmatpush1.msra.mxu0 %v946
    %1077 = vmatprep.subr.mxu0 0.0
    %1078 = vmatpush1.msra.mxu0 %v945
    %1079 = vmatprep.subr.mxu0 0.0
    %1080 = vmatpush2.msra.mxu0 %v976
    %1081 = vmatprep.subr.mxu0 0.0
    %1082 = vmatpush2.msra.mxu0 %v975
    %1083 = vmatprep.subr.mxu0 0.0
    %1084 = vmatpush2.msra.mxu0 %v974
    %1085 = vmatprep.subr.mxu0 0.0
    %1086 = vmatpush2.msra.mxu0 %v973
    %1087 = vmatprep.subr.mxu0 0.0
    %1088 = vmatpush2.msra.mxu0 %v972
    %1089 = vmatprep.subr.mxu0 0.0
    %1090 = vmatpush2.msra.mxu0 %v971
    %1091 = vmatprep.subr.mxu0 0.0
    %1092 = vmatpush2.msra.mxu0 %v970
    %1093 = vmatprep.subr.mxu0 0.0
    %1094 = vmatpush2.msra.mxu0 %v969
    %1095 = vmatprep.subr.mxu0 0.0
    %1096 = vmatpush2.msra.mxu0 %v968
    %1097 = vmatprep.subr.mxu0 0.0
    %1098 = vmatpush2.msra.mxu0 %v967
    %1099 = vmatprep.subr.mxu0 0.0
    %1100 = vmatpush2.msra.mxu0 %v966
    %1101 = vmatprep.subr.mxu0 0.0
    %1102 = vmatpush2.msra.mxu0 %v965
    %1103 = vmatprep.subr.mxu0 0.0
    %1104 = vmatpush2.msra.mxu0 %v964
    %1105 = vmatprep.subr.mxu0 0.0
    %1106 = vmatpush2.msra.mxu0 %v963
    %1107 = vmatprep.subr.mxu0 0.0
    %1108 = vmatpush2.msra.mxu0 %v962
    %1109 = vmatprep.subr.mxu0 0.0
    %1110 = vmatpush2.msra.mxu0 %v961
    %1111 = vmatprep.mubr.f32.mxu0 %v888
    %1112 = vmatmul.mubr.f32.gmra.mxu0 %v887
    %v1113 = vpop.f32.mrf.mxu0
    %v1114 = vadd.f32 %v1044, %v1113
    %v1115 = vpop.f32.mrf.mxu0
    %1116 = vdwg.mxu0
    %1117 = vmatprep.subr.mxu0 0.0
    %1118 = vmatpush1.msra.mxu0 %v904
    %1119 = vmatprep.subr.mxu0 0.0
    %1120 = vmatpush1.msra.mxu0 %v903
    %1121 = vmatprep.subr.mxu0 0.0
    %1122 = vmatpush1.msra.mxu0 %v902
    %1123 = vmatprep.subr.mxu0 0.0
    %1124 = vmatpush1.msra.mxu0 %v901
    %1125 = vmatprep.subr.mxu0 0.0
    %1126 = vmatpush1.msra.mxu0 %v900
    %1127 = vmatprep.subr.mxu0 0.0
    %1128 = vmatpush1.msra.mxu0 %v899
    %1129 = vmatprep.subr.mxu0 0.0
    %1130 = vmatpush1.msra.mxu0 %v898
    %1131 = vmatprep.subr.mxu0 0.0
    %1132 = vmatpush1.msra.mxu0 %v897
    %1133 = vmatprep.subr.mxu0 0.0
    %1134 = vmatpush1.msra.mxu0 %v896
    %1135 = vmatprep.subr.mxu0 0.0
    %1136 = vmatpush1.msra.mxu0 %v895
    %1137 = vmatprep.subr.mxu0 0.0
    %1138 = vmatpush1.msra.mxu0 %v894
    %1139 = vmatprep.subr.mxu0 0.0
    %1140 = vmatpush1.msra.mxu0 %v893
    %1141 = vmatprep.subr.mxu0 0.0
    %1142 = vmatpush1.msra.mxu0 %v892
    %1143 = vmatprep.subr.mxu0 0.0
    %1144 = vmatpush1.msra.mxu0 %v891
    %1145 = vmatprep.subr.mxu0 0.0
    %1146 = vmatpush1.msra.mxu0 %v890
    %1147 = vmatprep.subr.mxu0 0.0
    %1148 = vmatpush1.msra.mxu0 %v889
    %1149 = vmatprep.subr.mxu0 0.0
    %1150 = vmatpush2.msra.mxu0 0.0
    %1151 = vmatprep.subr.mxu0 0.0
    %1152 = vmatpush2.msra.mxu0 0.0
    %1153 = vmatprep.subr.mxu0 0.0
    %1154 = vmatpush2.msra.mxu0 0.0
    %1155 = vmatprep.subr.mxu0 0.0
    %1156 = vmatpush2.msra.mxu0 0.0
    %1157 = vmatprep.subr.mxu0 0.0
    %1158 = vmatpush2.msra.mxu0 0.0
    %1159 = vmatprep.subr.mxu0 0.0
    %1160 = vmatpush2.msra.mxu0 0.0
    %1161 = vmatprep.subr.mxu0 0.0
    %1162 = vmatpush2.msra.mxu0 0.0
    %1163 = vmatprep.subr.mxu0 0.0
    %1164 = vmatpush2.msra.mxu0 0.0
    %1165 = vmatprep.subr.mxu0 0.0
    %1166 = vmatpush2.msra.mxu0 %v912
    %1167 = vmatprep.subr.mxu0 0.0
    %1168 = vmatpush2.msra.mxu0 %v911
    %1169 = vmatprep.subr.mxu0 0.0
    %1170 = vmatpush2.msra.mxu0 %v910
    %1171 = vmatprep.subr.mxu0 0.0
    %1172 = vmatpush2.msra.mxu0 %v909
    %1173 = vmatprep.subr.mxu0 0.0
    %1174 = vmatpush2.msra.mxu0 %v908
    %1175 = vmatprep.subr.mxu0 0.0
    %1176 = vmatpush2.msra.mxu0 %v907
    %1177 = vmatprep.subr.mxu0 0.0
    %1178 = vmatpush2.msra.mxu0 %v906
    %1179 = vmatprep.subr.mxu0 0.0
    %1180 = vmatpush2.msra.mxu0 %v905
    %1181 = vmatprep.mubr.f32.mxu0 %v175
    %1182 = vmatmul.mubr.f32.gmra.mxu0 %v171
    %v1183 = vpop.f32.mrf.mxu0
    %v1184 = vadd.f32 %v1114, %v1183
    %v1185 = vpop.f32.mrf.mxu0
    %1186 = vdwg.mxu0
    %s1187 = sld [smem:[#allocation2]]
    %v1188 = vstv %s1187
    %v1189 = vadd.f32 %v1184, %v1188
    %vm1190 = vcmask 123904
    %1191 = vst.msk [vmem:[#allocation6] sm:$0x3] %vm1190, %v1189
    // Predicated region
    $region38: #{tpu_custom_call.1} parent=1 // pred_check
      _
    $region39: #{tpu_custom_call.1} parent=1 // pred_check_branch
      %1193 = sbr.rel (0) target = $region41
    $region40: #{tpu_custom_call.1} parent=1 // pred_region
      %s1195 = ssub.s32 32, 32
      %1196 = vsyncadd [#allocation5], %s1195
      %s1198 = sshll.u32 [#allocation6], 4
      %s1199 = int_to_ptr.vmem [resolvable:$true] %s1198
      %1201 = dma.vmem_to_hbm [thread:$0]  %s1199, 32, %s8, [#allocation5]
    $region41: #{tpu_custom_call.1} parent=1 // pred_fallthru
      _
    // Predicated region
    $region42: #{tpu_custom_call.1} parent=1 // pred_check
      _
    $region43: #{tpu_custom_call.1} parent=1 // pred_check_branch
      %1203 = sbr.rel (0) target = $region45
    $region44: #{tpu_custom_call.1} parent=1 // pred_region
      %1204 = dma.done [#allocation5], 32
    $region45: #{tpu_custom_call.1} parent=1 // pred_fallthru
      _
    %1205 = vsyncpa [#allocation4], 1
    %1206 = vsyncpa [#allocation5], 1

</llo_original>
